<compile_context>
chip_gen: v6e
topology: v6e:2x2x1
jax: 0.10.0
libtpu: 0.0.40
codegen_flags: <defaults>
</compile_context>

<pallas_src>
import jax
import jax.numpy as jnp
import numpy as np
from jax.experimental import pallas as pl
from jax.experimental.pallas import tpu as pltpu

EPS = 1e-5
TB_MAX = 1024  # max batch tile (M dimension of the MXU matmuls)


def _round_up(n, m):
    return (n + m - 1) // m * m


def _cdiv(a, b):
    return (a + b - 1) // b


def net_kernel(x_ref,
               w1_ref, b1_ref,
               w2_ref, b2_ref,
               w3_ref, b3_ref,
               wout_ref, bout_ref,
               o_ref):
    xb = x_ref[...]                                                   # (TB,1024) bf16

    # --- LN1: one-pass f32 stats; affine already folded into w1/b1 ---
    xf = xb.astype(jnp.float32)
    mu1 = jnp.mean(xf, axis=-1, keepdims=True)                        # (TB,1)
    ex2_1 = jnp.mean(xf * xf, axis=-1, keepdims=True)
    var1 = jnp.maximum(ex2_1 - mu1 * mu1, 0.0)
    inv_std1 = jax.lax.rsqrt(var1 + EPS)                              # (TB,1)
    xc = xb - mu1.astype(jnp.bfloat16)                                # bf16 centering

    # --- fc1 + ReLU (inv_std commuted past the matmul: scale 256 lanes) ---
    h = jnp.dot(xc, w1_ref[...], preferred_element_type=jnp.float32)  # (TB,256)
    h = jnp.maximum(h * inv_std1 + b1_ref[...], 0.0).astype(jnp.bfloat16)

    # --- fc2 + ReLU (+ dropout == identity in eval) ---
    h2 = jnp.dot(h, w2_ref[...], preferred_element_type=jnp.float32)  # (TB,128)
    h2 = jnp.maximum(h2 + b2_ref[...], 0.0)

    # --- LN3 (affine folded into w3/b3) ---
    mu3 = jnp.mean(h2, axis=-1, keepdims=True)
    ex2_3 = jnp.mean(h2 * h2, axis=-1, keepdims=True)
    var3 = jnp.maximum(ex2_3 - mu3 * mu3, 0.0)
    inv_std3 = jax.lax.rsqrt(var3 + EPS)
    h2c = (h2 - mu3).astype(jnp.bfloat16)

    # --- fc3 + ReLU (scale the 32-wide output, not the 128-wide input) ---
    h3 = jnp.dot(h2c, w3_ref[...], preferred_element_type=jnp.float32)  # (TB,32)
    h3 = jnp.maximum(h3 * inv_std3 + b3_ref[...], 0.0)

    # --- LN4 (affine folded into wout/bout) + fcOut as a VPU lane-reduce ---
    mu4 = jnp.mean(h3, axis=-1, keepdims=True)
    ex2_4 = jnp.mean(h3 * h3, axis=-1, keepdims=True)
    var4 = jnp.maximum(ex2_4 - mu4 * mu4, 0.0)
    inv_std4 = jax.lax.rsqrt(var4 + EPS)

    out = jnp.sum((h3 - mu4) * wout_ref[...], axis=-1, keepdims=True)  # (TB,1)
    out = out * inv_std4 + bout_ref[...]                               # (TB,1)

    # lane-dense store: broadcast along the 8 sublanes of the (1,8,TB) block
    o_ref[...] = jnp.broadcast_to(out.reshape(1, 1, -1), o_ref.shape).astype(o_ref.dtype)


def fold_layernorm_params(params):
    """Fold each LayerNorm's affine into the following Linear (exact, f32).

    LN(x) @ W + b = ((x-mu)*inv_std) @ (g[:,None]*W) + (beta @ W + b)
    """
    (ln1w, ln1b, w1, b1, w2, b2, ln3w, ln3b, w3, b3, ln4w, ln4b, wout, bout) = params

    w1_f32 = w1.astype(jnp.float32)
    w1f = (ln1w.reshape(-1, 1) * w1_f32).astype(jnp.bfloat16)          # (1024,256)
    b1f = b1 + ln1b @ w1_f32                                           # (1,256)

    w3_f32 = w3.astype(jnp.float32)
    w3f = (ln3w.reshape(-1, 1) * w3_f32).astype(jnp.bfloat16)          # (128,32)
    b3f = b3 + ln3b @ w3_f32                                           # (1,32)

    woutf = (ln4w * wout).astype(jnp.float32)                          # (1,32)
    boutf = bout + jnp.sum(ln4b * wout, axis=-1, keepdims=True)        # (1,1)

    return (w1f, b1f, w2, b2, w3f, b3f, woutf, boutf)


def _forward_all(x, folded):
    """x: (T, 1024). Returns (T, 1) f32 = Net.forward_once applied row-wise."""
    total, D = x.shape
    assert D == 1024

    w1f, b1f, w2, b2, w3f, b3f, woutf, boutf = folded
    plist = [w1f, b1f, w2, b2, w3f, b3f, woutf, boutf]

    # Balanced tiles: big enough to amortize ~0.35us/step grid overhead, at
    # least 2 when possible (v7x second TensorCore), multiple of 16 for bf16.
    want_tiles = max(2, _cdiv(total, TB_MAX))
    tb = min(TB_MAX, _round_up(_cdiv(total, want_tiles), 16))
    padded = _round_up(total, tb)
    num_tiles = padded // tb

    xb = x.astype(jnp.bfloat16)
    if padded != total:
        xb = jnp.pad(xb, ((0, padded - total), (0, 0)))

    full = lambda arr: pl.BlockSpec(arr.shape, lambda i: (0,) * arr.ndim)

    cost = pl.CostEstimate(
        flops=2 * padded * (1024 * 256 + 256 * 128 + 128 * 32 + 32),
        transcendentals=3 * padded,  # one rsqrt per LayerNorm per row
        bytes_accessed=padded * 1024 * 2 + num_tiles * 8 * tb * 4
        + sum(int(p.size) * p.dtype.itemsize for p in plist),
    )

    out = pl.pallas_call(
        net_kernel,
        out_shape=jax.ShapeDtypeStruct((num_tiles, 8, tb), jnp.float32),
        grid_spec=pltpu.PrefetchScalarGridSpec(
            num_scalar_prefetch=0,
            grid=(num_tiles,),
            in_specs=[pl.BlockSpec((tb, 1024), lambda i: (i, 0))]
                     + [full(p) for p in plist],
            out_specs=pl.BlockSpec((1, 8, tb), lambda i: (i, 0, 0)),
        ),
        compiler_params=pltpu.CompilerParams(
            dimension_semantics=("parallel",),
            vmem_limit_bytes=48 * 1024 * 1024),
        cost_estimate=cost,
    )(xb, *plist)

    # keep sublane 0 of each tile, drop batch padding
    return out[:, 0, :].reshape(padded, 1)[:total]


def net_forward(x1, x2, x3, params):
    """Triplet forward: all three arms fused into a single pallas_call."""
    folded = fold_layernorm_params(params)
    b1, b2, b3 = x1.shape[0], x2.shape[0], x3.shape[0]
    x = jnp.concatenate([x1, x2, x3], axis=0)
    out = _forward_all(x, folded)
    return out[:b1], out[b1:b1 + b2], out[b1 + b2:b1 + b2 + b3]


def init_params(key):
    """Deterministic synthetic parameters matching the module's shapes.

    Linear weights stored as (in, out) = W^T in bf16 (native MXU dtype);
    biases and LayerNorm parameters stay f32. fcOut kept f32 as a (1, 32)
    row + (1, 1) bias (evaluated as a lane reduction in the kernel).
    """
    ks = jax.random.split(key, 4)

    def lin(k, fan_in, fan_out, w_dtype=jnp.bfloat16):
        kw, kb = jax.random.split(k)
        bound = 1.0 / jnp.sqrt(fan_in)
        w = jax.random.uniform(kw, (fan_in, fan_out), jnp.float32, -bound, bound)
        b = jax.random.uniform(kb, (1, fan_out), jnp.float32, -bound, bound)
        return w.astype(w_dtype), b

    w1, b1 = lin(ks[0], 1024, 256)
    w2, b2 = lin(ks[1], 256, 128)
    w3, b3 = lin(ks[2], 128, 32)
    wout, bout = lin(ks[3], 32, 1, w_dtype=jnp.float32)
    wout = wout.reshape(1, 32)   # row vector for the in-kernel lane reduction
    bout = bout.reshape(1, 1)

    # LayerNorm default init: weight=1, bias=0 (exact PyTorch defaults)
    ln1w = jnp.ones((1, 1024), jnp.float32)
    ln1b = jnp.zeros((1, 1024), jnp.float32)
    ln3w = jnp.ones((1, 128), jnp.float32)
    ln3b = jnp.zeros((1, 128), jnp.float32)
    ln4w = jnp.ones((1, 32), jnp.float32)
    ln4b = jnp.zeros((1, 32), jnp.float32)

    return (ln1w, ln1b, w1, b1, w2, b2, ln3w, ln3b, w3, b3, ln4w, ln4b, wout, bout)


if __name__ == "__main__":
    key = jax.random.PRNGKey(0)
    pkey, k1, k2, k3 = jax.random.split(key, 4)

    params = init_params(pkey)

    B = 8  # small batch per triplet arm
    x1 = jax.random.normal(k1, (B, 1024), jnp.float32)
    x2 = jax.random.normal(k2, (B, 1024), jnp.float32)
    x3 = jax.random.normal(k3, (B, 1024), jnp.float32)

    o1, o2, o3 = net_forward(x1, x2, x3, params)
    jax.block_until_ready((o1, o2, o3))

    # sanity check against a pure-JAX f32 reference (bf16 matmuls / bf16 x in
    # the kernel -> loosened tolerance; f32 accumulation keeps drift small)
    def ref_once(x):
        (ln1w, ln1b, w1, b1, w2, b2, ln3w, ln3b, w3, b3,
         ln4w, ln4b, wout, bout) = params

        def ln(v, w, b):
            mu = v.mean(-1, keepdims=True)
            var = ((v - mu) ** 2).mean(-1, keepdims=True)
            return (v - mu) / jnp.sqrt(var + EPS) * w + b

        h = ln(x, ln1w, ln1b)
        h = jnp.maximum(h @ w1.astype(jnp.float32) + b1, 0.0)
        h = jnp.maximum(h @ w2.astype(jnp.float32) + b2, 0.0)
        h = ln(h, ln3w, ln3b)
        h = jnp.maximum(h @ w3.astype(jnp.float32) + b3, 0.0)
        h = ln(h, ln4w, ln4b)
        return h @ wout.T + bout

    np.testing.assert_allclose(np.asarray(o1), np.asarray(ref_once(x1)), rtol=5e-2, atol=5e-2)
    np.testing.assert_allclose(np.asarray(o2), np.asarray(ref_once(x2)), rtol=5e-2, atol=5e-2)
    np.testing.assert_allclose(np.asarray(o3), np.asarray(ref_once(x3)), rtol=5e-2, atol=5e-2)

    print("KERNEL_OK")
</pallas_src>

<mosaic_0001>
module attributes {stable_mosaic.version = 11 : i64} {
  func.func @net_kernel(%arg0: i32, %arg1: memref<16x1024xbf16, #tpu.memory_space<vmem>>, %arg2: memref<1024x256xbf16, #tpu.memory_space<vmem>>, %arg3: memref<1x256xf32, #tpu.memory_space<vmem>>, %arg4: memref<256x128xbf16, #tpu.memory_space<vmem>>, %arg5: memref<1x128xf32, #tpu.memory_space<vmem>>, %arg6: memref<128x32xbf16, #tpu.memory_space<vmem>>, %arg7: memref<1x32xf32, #tpu.memory_space<vmem>>, %arg8: memref<1x32xf32, #tpu.memory_space<vmem>>, %arg9: memref<1x1xf32, #tpu.memory_space<vmem>>, %arg10: memref<1x8x16xf32, #tpu.memory_space<vmem>>) attributes {dimension_semantics = [#tpu.dimension_semantics<parallel>], iteration_bounds = array<i64: 2>, scalar_prefetch = 0 : i64, scratch_operands = 0 : i64, tpu.core_type = #tpu.core_type<tc>, window_params = [{transform_indices = @transform_0, window_bounds = array<i64: 16, 1024>}, {pipeline_mode = #tpu.pipeline_mode<synchronous>, transform_indices = @transform_1, window_bounds = array<i64: 1024, 256>}, {pipeline_mode = #tpu.pipeline_mode<synchronous>, transform_indices = @transform_2, window_bounds = array<i64: 1, 256>}, {pipeline_mode = #tpu.pipeline_mode<synchronous>, transform_indices = @transform_3, window_bounds = array<i64: 256, 128>}, {pipeline_mode = #tpu.pipeline_mode<synchronous>, transform_indices = @transform_4, window_bounds = array<i64: 1, 128>}, {pipeline_mode = #tpu.pipeline_mode<synchronous>, transform_indices = @transform_5, window_bounds = array<i64: 128, 32>}, {pipeline_mode = #tpu.pipeline_mode<synchronous>, transform_indices = @transform_6, window_bounds = array<i64: 1, 32>}, {pipeline_mode = #tpu.pipeline_mode<synchronous>, transform_indices = @transform_7, window_bounds = array<i64: 1, 32>}, {pipeline_mode = #tpu.pipeline_mode<synchronous>, transform_indices = @transform_8, window_bounds = array<i64: 1, 1>}, {transform_indices = @transform_9, window_bounds = array<i64: 1, 8, 16>}]} {
    %c0 = arith.constant 0 : index
    %c0_0 = arith.constant 0 : index
    %0 = vector.load %arg1[%c0, %c0_0] : memref<16x1024xbf16, #tpu.memory_space<vmem>>, vector<16x1024xbf16>
    %1 = arith.extf %0 : vector<16x1024xbf16> to vector<16x1024xf32>
    %cst = arith.constant dense<0.000000e+00> : vector<16xf32>
    %2 = vector.multi_reduction <add>, %1, %cst [1] : vector<16x1024xf32> to vector<16xf32>
    %3 = vector.shape_cast %2 : vector<16xf32> to vector<16x1xf32>
    %cst_1 = arith.constant 1.024000e+03 : f32
    %4 = vector.broadcast %cst_1 : f32 to vector<16x1xf32>
    %5 = arith.divf %3, %4 : vector<16x1xf32>
    %6 = arith.mulf %1, %1 : vector<16x1024xf32>
    %cst_2 = arith.constant dense<0.000000e+00> : vector<16xf32>
    %7 = vector.multi_reduction <add>, %6, %cst_2 [1] : vector<16x1024xf32> to vector<16xf32>
    %8 = vector.shape_cast %7 : vector<16xf32> to vector<16x1xf32>
    %cst_3 = arith.constant 1.024000e+03 : f32
    %9 = vector.broadcast %cst_3 : f32 to vector<16x1xf32>
    %10 = arith.divf %8, %9 : vector<16x1xf32>
    %11 = arith.mulf %5, %5 : vector<16x1xf32>
    %12 = arith.subf %10, %11 : vector<16x1xf32>
    %cst_4 = arith.constant 0.000000e+00 : f32
    %13 = vector.broadcast %cst_4 : f32 to vector<16x1xf32>
    %14 = arith.maximumf %12, %13 : vector<16x1xf32>
    %cst_5 = arith.constant 9.99999974E-6 : f32
    %15 = vector.broadcast %cst_5 : f32 to vector<16x1xf32>
    %16 = arith.addf %14, %15 : vector<16x1xf32>
    %17 = math.rsqrt %16 : vector<16x1xf32>
    %18 = arith.truncf %5 : vector<16x1xf32> to vector<16x1xbf16>
    %19 = vector.broadcast %18 : vector<16x1xbf16> to vector<16x1024xbf16>
    %20 = arith.subf %0, %19 : vector<16x1024xbf16>
    %c0_6 = arith.constant 0 : index
    %c0_7 = arith.constant 0 : index
    %21 = vector.load %arg2[%c0_6, %c0_7] : memref<1024x256xbf16, #tpu.memory_space<vmem>>, vector<1024x256xbf16>
    %cst_8 = arith.constant dense<0.000000e+00> : vector<16x256xf32>
    %22 = tpu.matmul %20, %21, %cst_8 {dimension_numbers = #tpu.dot_dimension_numbers<[1], [0], [0], [1], [0, 0, 1, 1], [], []>} : vector<16x1024xbf16>, vector<1024x256xbf16>, vector<16x256xf32> -> vector<16x256xf32>
    %23 = vector.broadcast %17 : vector<16x1xf32> to vector<16x256xf32>
    %24 = arith.mulf %22, %23 : vector<16x256xf32>
    %c0_9 = arith.constant 0 : index
    %c0_10 = arith.constant 0 : index
    %25 = vector.load %arg3[%c0_9, %c0_10] : memref<1x256xf32, #tpu.memory_space<vmem>>, vector<1x256xf32>
    %26 = vector.broadcast %25 : vector<1x256xf32> to vector<16x256xf32>
    %27 = arith.addf %24, %26 : vector<16x256xf32>
    %cst_11 = arith.constant 0.000000e+00 : f32
    %28 = vector.broadcast %cst_11 : f32 to vector<16x256xf32>
    %29 = arith.maximumf %27, %28 : vector<16x256xf32>
    %30 = arith.truncf %29 : vector<16x256xf32> to vector<16x256xbf16>
    %c0_12 = arith.constant 0 : index
    %c0_13 = arith.constant 0 : index
    %31 = vector.load %arg4[%c0_12, %c0_13] : memref<256x128xbf16, #tpu.memory_space<vmem>>, vector<256x128xbf16>
    %cst_14 = arith.constant dense<0.000000e+00> : vector<16x128xf32>
    %32 = tpu.matmul %30, %31, %cst_14 {dimension_numbers = #tpu.dot_dimension_numbers<[1], [0], [0], [1], [0, 0, 1, 1], [], []>} : vector<16x256xbf16>, vector<256x128xbf16>, vector<16x128xf32> -> vector<16x128xf32>
    %c0_15 = arith.constant 0 : index
    %c0_16 = arith.constant 0 : index
    %33 = vector.load %arg5[%c0_15, %c0_16] : memref<1x128xf32, #tpu.memory_space<vmem>>, vector<1x128xf32>
    %34 = vector.broadcast %33 : vector<1x128xf32> to vector<16x128xf32>
    %35 = arith.addf %32, %34 : vector<16x128xf32>
    %cst_17 = arith.constant 0.000000e+00 : f32
    %36 = vector.broadcast %cst_17 : f32 to vector<16x128xf32>
    %37 = arith.maximumf %35, %36 : vector<16x128xf32>
    %cst_18 = arith.constant dense<0.000000e+00> : vector<16xf32>
    %38 = vector.multi_reduction <add>, %37, %cst_18 [1] : vector<16x128xf32> to vector<16xf32>
    %39 = vector.shape_cast %38 : vector<16xf32> to vector<16x1xf32>
    %cst_19 = arith.constant 1.280000e+02 : f32
    %40 = vector.broadcast %cst_19 : f32 to vector<16x1xf32>
    %41 = arith.divf %39, %40 : vector<16x1xf32>
    %42 = arith.mulf %37, %37 : vector<16x128xf32>
    %cst_20 = arith.constant dense<0.000000e+00> : vector<16xf32>
    %43 = vector.multi_reduction <add>, %42, %cst_20 [1] : vector<16x128xf32> to vector<16xf32>
    %44 = vector.shape_cast %43 : vector<16xf32> to vector<16x1xf32>
    %cst_21 = arith.constant 1.280000e+02 : f32
    %45 = vector.broadcast %cst_21 : f32 to vector<16x1xf32>
    %46 = arith.divf %44, %45 : vector<16x1xf32>
    %47 = arith.mulf %41, %41 : vector<16x1xf32>
    %48 = arith.subf %46, %47 : vector<16x1xf32>
    %cst_22 = arith.constant 0.000000e+00 : f32
    %49 = vector.broadcast %cst_22 : f32 to vector<16x1xf32>
    %50 = arith.maximumf %48, %49 : vector<16x1xf32>
    %cst_23 = arith.constant 9.99999974E-6 : f32
    %51 = vector.broadcast %cst_23 : f32 to vector<16x1xf32>
    %52 = arith.addf %50, %51 : vector<16x1xf32>
    %53 = math.rsqrt %52 : vector<16x1xf32>
    %54 = vector.broadcast %41 : vector<16x1xf32> to vector<16x128xf32>
    %55 = arith.subf %37, %54 : vector<16x128xf32>
    %56 = arith.truncf %55 : vector<16x128xf32> to vector<16x128xbf16>
    %c0_24 = arith.constant 0 : index
    %c0_25 = arith.constant 0 : index
    %57 = vector.load %arg6[%c0_24, %c0_25] : memref<128x32xbf16, #tpu.memory_space<vmem>>, vector<128x32xbf16>
    %cst_26 = arith.constant dense<0.000000e+00> : vector<16x32xf32>
    %58 = tpu.matmul %56, %57, %cst_26 {dimension_numbers = #tpu.dot_dimension_numbers<[1], [0], [0], [1], [0, 0, 1, 1], [], []>} : vector<16x128xbf16>, vector<128x32xbf16>, vector<16x32xf32> -> vector<16x32xf32>
    %59 = vector.broadcast %53 : vector<16x1xf32> to vector<16x32xf32>
    %60 = arith.mulf %58, %59 : vector<16x32xf32>
    %c0_27 = arith.constant 0 : index
    %c0_28 = arith.constant 0 : index
    %61 = vector.load %arg7[%c0_27, %c0_28] : memref<1x32xf32, #tpu.memory_space<vmem>>, vector<1x32xf32>
    %62 = vector.broadcast %61 : vector<1x32xf32> to vector<16x32xf32>
    %63 = arith.addf %60, %62 : vector<16x32xf32>
    %cst_29 = arith.constant 0.000000e+00 : f32
    %64 = vector.broadcast %cst_29 : f32 to vector<16x32xf32>
    %65 = arith.maximumf %63, %64 : vector<16x32xf32>
    %cst_30 = arith.constant dense<0.000000e+00> : vector<16xf32>
    %66 = vector.multi_reduction <add>, %65, %cst_30 [1] : vector<16x32xf32> to vector<16xf32>
    %67 = vector.shape_cast %66 : vector<16xf32> to vector<16x1xf32>
    %cst_31 = arith.constant 3.200000e+01 : f32
    %68 = vector.broadcast %cst_31 : f32 to vector<16x1xf32>
    %69 = arith.divf %67, %68 : vector<16x1xf32>
    %70 = arith.mulf %65, %65 : vector<16x32xf32>
    %cst_32 = arith.constant dense<0.000000e+00> : vector<16xf32>
    %71 = vector.multi_reduction <add>, %70, %cst_32 [1] : vector<16x32xf32> to vector<16xf32>
    %72 = vector.shape_cast %71 : vector<16xf32> to vector<16x1xf32>
    %cst_33 = arith.constant 3.200000e+01 : f32
    %73 = vector.broadcast %cst_33 : f32 to vector<16x1xf32>
    %74 = arith.divf %72, %73 : vector<16x1xf32>
    %75 = arith.mulf %69, %69 : vector<16x1xf32>
    %76 = arith.subf %74, %75 : vector<16x1xf32>
    %cst_34 = arith.constant 0.000000e+00 : f32
    %77 = vector.broadcast %cst_34 : f32 to vector<16x1xf32>
    %78 = arith.maximumf %76, %77 : vector<16x1xf32>
    %cst_35 = arith.constant 9.99999974E-6 : f32
    %79 = vector.broadcast %cst_35 : f32 to vector<16x1xf32>
    %80 = arith.addf %78, %79 : vector<16x1xf32>
    %81 = math.rsqrt %80 : vector<16x1xf32>
    %82 = vector.broadcast %69 : vector<16x1xf32> to vector<16x32xf32>
    %83 = arith.subf %65, %82 : vector<16x32xf32>
    %c0_36 = arith.constant 0 : index
    %c0_37 = arith.constant 0 : index
    %84 = vector.load %arg8[%c0_36, %c0_37] : memref<1x32xf32, #tpu.memory_space<vmem>>, vector<1x32xf32>
    %85 = vector.broadcast %84 : vector<1x32xf32> to vector<16x32xf32>
    %86 = arith.mulf %83, %85 : vector<16x32xf32>
    %cst_38 = arith.constant dense<0.000000e+00> : vector<16xf32>
    %87 = vector.multi_reduction <add>, %86, %cst_38 [1] : vector<16x32xf32> to vector<16xf32>
    %88 = vector.shape_cast %87 : vector<16xf32> to vector<16x1xf32>
    %89 = arith.mulf %88, %81 : vector<16x1xf32>
    %c0_39 = arith.constant 0 : index
    %c0_40 = arith.constant 0 : index
    %90 = vector.load %arg9[%c0_39, %c0_40] : memref<1x1xf32, #tpu.memory_space<vmem>>, vector<1x1xf32>
    %91 = vector.broadcast %90 : vector<1x1xf32> to vector<16x1xf32>
    %92 = arith.addf %89, %91 : vector<16x1xf32>
    %93 = vector.shape_cast %92 : vector<16x1xf32> to vector<1x1x16xf32>
    %94 = vector.shape_cast %93 : vector<1x1x16xf32> to vector<1x1x16xf32>
    %95 = vector.broadcast %94 : vector<1x1x16xf32> to vector<1x8x16xf32>
    %c0_41 = arith.constant 0 : index
    %c0_42 = arith.constant 0 : index
    %c0_43 = arith.constant 0 : index
    %96 = vector.load %arg10[%c0_41, %c0_42, %c0_43] : memref<1x8x16xf32, #tpu.memory_space<vmem>>, vector<1x8x16xf32>
    tpu.vector_store %arg10[%c0_41, %c0_42, %c0_43], %95 {strides = array<i32>} : memref<1x8x16xf32, #tpu.memory_space<vmem>>, vector<1x8x16xf32>,
    return
  }
  func.func @transform_0(%arg0: i32) -> (i32, i32) {
    %c0_i32 = arith.constant 0 : i32
    %c0_i32_0 = arith.constant 0 : i32
    return %arg0, %c0_i32 : i32, i32
  }
  func.func @transform_1(%arg0: i32) -> (i32, i32) {
    %c0_i32 = arith.constant 0 : i32
    %c0_i32_0 = arith.constant 0 : i32
    %c0_i32_1 = arith.constant 0 : i32
    return %c0_i32, %c0_i32_0 : i32, i32
  }
  func.func @transform_2(%arg0: i32) -> (i32, i32) {
    %c0_i32 = arith.constant 0 : i32
    %c0_i32_0 = arith.constant 0 : i32
    %c0_i32_1 = arith.constant 0 : i32
    return %c0_i32, %c0_i32_0 : i32, i32
  }
  func.func @transform_3(%arg0: i32) -> (i32, i32) {
    %c0_i32 = arith.constant 0 : i32
    %c0_i32_0 = arith.constant 0 : i32
    %c0_i32_1 = arith.constant 0 : i32
    return %c0_i32, %c0_i32_0 : i32, i32
  }
  func.func @transform_4(%arg0: i32) -> (i32, i32) {
    %c0_i32 = arith.constant 0 : i32
    %c0_i32_0 = arith.constant 0 : i32
    %c0_i32_1 = arith.constant 0 : i32
    return %c0_i32, %c0_i32_0 : i32, i32
  }
  func.func @transform_5(%arg0: i32) -> (i32, i32) {
    %c0_i32 = arith.constant 0 : i32
    %c0_i32_0 = arith.constant 0 : i32
    %c0_i32_1 = arith.constant 0 : i32
    return %c0_i32, %c0_i32_0 : i32, i32
  }
  func.func @transform_6(%arg0: i32) -> (i32, i32) {
    %c0_i32 = arith.constant 0 : i32
    %c0_i32_0 = arith.constant 0 : i32
    %c0_i32_1 = arith.constant 0 : i32
    return %c0_i32, %c0_i32_0 : i32, i32
  }
  func.func @transform_7(%arg0: i32) -> (i32, i32) {
    %c0_i32 = arith.constant 0 : i32
    %c0_i32_0 = arith.constant 0 : i32
    %c0_i32_1 = arith.constant 0 : i32
    return %c0_i32, %c0_i32_0 : i32, i32
  }
  func.func @transform_8(%arg0: i32) -> (i32, i32) {
    %c0_i32 = arith.constant 0 : i32
    %c0_i32_0 = arith.constant 0 : i32
    %c0_i32_1 = arith.constant 0 : i32
    return %c0_i32, %c0_i32_0 : i32, i32
  }
  func.func @transform_9(%arg0: i32) -> (i32, i32, i32) {
    %c0_i32 = arith.constant 0 : i32
    %c0_i32_0 = arith.constant 0 : i32
    %c0_i32_1 = arith.constant 0 : i32
    return %arg0, %c0_i32, %c0_i32_0 : i32, i32, i32
  }
}

</mosaic_0001>

<llo_original>
// kernel: tpu_custom_call.1
$region0: #{tpu_custom_call.1}
  #allocation0 [shape = 'u32[]', space=smem, size = 0x4, offset = 0x4, fixed_abs, tag = 'smem constant byte address 0x4 - core index']
  #allocation1 [shape = 'u32[144,128]{1,0:T(1,128)}', space=vmem, size = 0x12000, scoped, tag = 'internal scratch']
  #allocation2 [shape = 'f32[1,1]{1,0:T(1,128)S(1)}', space=vmem, size = 0x200, scoped, tag = 'scoped memory for tpu_custom_call.1']
  %s0 = inlined_call_operand.hbm [shape: bf16[32,1024], index: 0, kind: input, shape index: {}]
  %s1 = inlined_call_operand.hbm [shape: bf16[1024,256], index: 1, kind: input, shape index: {}]
  %s2 = inlined_call_operand.vmem [shape: f32[1,256], index: 2, kind: input, shape index: {}]
  %s3 = inlined_call_operand.hbm [shape: bf16[256,128], index: 3, kind: input, shape index: {}]
  %s4 = inlined_call_operand.vmem [shape: f32[1,128], index: 4, kind: input, shape index: {}]
  %s5 = inlined_call_operand.vmem [shape: bf16[128,32], index: 5, kind: input, shape index: {}]
  %s6 = inlined_call_operand.vmem [shape: f32[1,32], index: 6, kind: input, shape index: {}]
  %s7 = inlined_call_operand.vmem [shape: f32[1,32], index: 7, kind: input, shape index: {}]
  %s8 = inlined_call_operand.<no memory space> [shape: f32[1,1], index: 8, kind: input, shape index: {}]
  %s9 = inlined_call_operand.hbm [shape: f32[2,8,16], index: 9, kind: output, shape index: {}]
  %s10 = sld [smem:[#allocation0]]
  $region81: #{tpu_custom_call.1} parent=0
    _
  %s12 = ssub.s32 1, %s10
  %s13 = scalar_select 0, %s12, %s10
  %v14 = vstv %s8
  %15 = vst [vmem:[#allocation2] sm:$0x1] %v14
  $region1: #{tpu_custom_call.1} parent=0
    #allocation3 [shape = 'u8[65536]{0}', space=vmem, size = 0x10000, scoped, tag = 'input window, operand 0']
    #allocation4 [shape = 's32[2]{0}', space=sflag, size = 0x8, scoped, tag = 'scoped memory for tpu_custom_call.1']
    #allocation5 [shape = 's32[2]{0}', space=sflag, size = 0x8, scoped, tag = 'scoped memory for tpu_custom_call.1']
    #allocation6 [shape = 'u8[524288]{0}', space=vmem, size = 0x80000, scoped, tag = 'input window, operand 1, single buffered']
    #allocation7 [shape = 's32[1]{0}', space=sflag, size = 0x4, scoped, tag = 'scoped memory for tpu_custom_call.1']
    #allocation8 [shape = 'u8[65536]{0}', space=vmem, size = 0x10000, scoped, tag = 'input window, operand 3, single buffered']
    #allocation9 [shape = 'u8[8192]{0}', space=vmem, size = 0x2000, scoped, tag = 'output window, operand 0']
    %16 = vsyncpa [#allocation4], 0
    %s17 = scalar_lea.sflag [#allocation4], 1
    %18 = vsyncpa %s17, 0
    %19 = vsyncpa [#allocation7], 0
    %20 = vsyncpa [#allocation5], 0
    %s21 = scalar_lea.sflag [#allocation5], 1
    %22 = vsyncpa %s21, 0
    loop: start=0, step=1, limit=4
    $region2: #{tpu_custom_call.1} parent=1 // loop_pre_header
      _
    $region3: #{tpu_custom_call.1} parent=1 // loop_header
      %s24 = sphi 0, %s28
      %p25 = scmp.ge.s32.totalorder %s24, 4
      %s34 = sphi 0, %s36
      %s37 = sphi 0, %s34
      %s38 = sphi 0, %s37
      %s54 = sphi 0, %s38
      %s58 = sphi 0, %s58
      %s60 = sphi 0, %s58
      %s61 = sphi 0, %s60
      %s75 = sphi 0, %s61
      %s79 = sphi 0, %s79
      %s81 = sphi 0, %s79
      %s82 = sphi 0, %s81
      %s96 = sphi 0, %s82
      %s100 = sphi 0, %s100
      %s102 = sphi 0, %s100
      %s103 = sphi 0, %s102
      %s117 = sphi 0, %s103
      %s121 = sphi 0, %s121
      %s123 = sphi 0, %s121
      %s124 = sphi 0, %s123
      %s138 = sphi 0, %s124
      %s142 = sphi 0, %s142
      %s144 = sphi 0, %s142
      %s145 = sphi 0, %s144
      %s159 = sphi 0, %s145
      %s163 = sphi 0, %s163
      %s165 = sphi 0, %s163
      %s166 = sphi 0, %s165
      %s180 = sphi 0, %s166
      %s184 = sphi 0, %s184
      %s186 = sphi 0, %s184
      %s187 = sphi 0, %s186
      %s201 = sphi 0, %s187
      %s205 = sphi 0, %s205
      %s207 = sphi 0, %s205
      %s208 = sphi 0, %s207
      %s222 = sphi 0, %s208
      %s228 = sphi 0, %s230
      %s231 = sphi 0, %s228
      %s232 = sphi 0, %s231
      %s248 = sphi 0, %s232
    $region4: #{tpu_custom_call.1} parent=1 // loop_header_branch
      %27 = sbr.rel (%p25) target = $region8
    $region5: #{tpu_custom_call.1} parent=1 // loop_body
      %s29 = ssub.s32 %s24, 1
      %s30 = ssub.s32 %s24, 2
      %s31 = sadd.s32 %s24, 1
      %s32 = ssub.s32 %s24, %s31
      %p33 = scmp.eq.s32.totalorder %s32, 0
      %s35 = sadd.s32 %s34, 1
      %s36 = scalar_select %p33, %s34, %s35
      %p39 = pneg %p33
      %p40 = scmp.eq.s32.totalorder %s24, 1
      %p41 = por %p39, %p40
      %p42 = scmp.ne.s32.totalorder %s34, %s37
      %p43 = scmp.eq.s32.totalorder %s24, 0
      %p44 = por %p42, %p43
      %p45 = scmp.ne.s32.totalorder %s34, %s37
      %p46 = scmp.eq.s32.totalorder %s29, 1
      %p47 = por %p45, %p46
      %p48 = scmp.ne.s32.totalorder %s37, %s38
      %p49 = scmp.eq.s32.totalorder %s29, 0
      %p50 = por %p48, %p49
      %p51 = scmp.ne.s32.totalorder %s37, %s38
      %p52 = scmp.eq.s32.totalorder %s30, 1
      %p53 = por %p51, %p52
      %p55 = scmp.ne.s32.totalorder %s38, %s54
      %p56 = scmp.eq.s32.totalorder %s30, 0
      %p57 = por %p55, %p56
      %s59 = sadd.s32 %s58, 1
      %p62 = scmp.eq.s32.totalorder %s24, 1
      %p63 = scmp.ne.s32.totalorder %s58, %s60
      %p64 = scmp.eq.s32.totalorder %s24, 0
      %p65 = por %p63, %p64
      %p66 = scmp.ne.s32.totalorder %s58, %s60
      %p67 = scmp.eq.s32.totalorder %s29, 1
      %p68 = por %p66, %p67
      %p69 = scmp.ne.s32.totalorder %s60, %s61
      %p70 = scmp.eq.s32.totalorder %s29, 0
      %p71 = por %p69, %p70
      %p72 = scmp.ne.s32.totalorder %s60, %s61
      %p73 = scmp.eq.s32.totalorder %s30, 1
      %p74 = por %p72, %p73
      %p76 = scmp.ne.s32.totalorder %s61, %s75
      %p77 = scmp.eq.s32.totalorder %s30, 0
      %p78 = por %p76, %p77
      %s80 = sadd.s32 %s79, 1
      %p83 = scmp.eq.s32.totalorder %s24, 1
      %p84 = scmp.ne.s32.totalorder %s79, %s81
      %p85 = scmp.eq.s32.totalorder %s24, 0
      %p86 = por %p84, %p85
      %p87 = scmp.ne.s32.totalorder %s79, %s81
      %p88 = scmp.eq.s32.totalorder %s29, 1
      %p89 = por %p87, %p88
      %p90 = scmp.ne.s32.totalorder %s81, %s82
      %p91 = scmp.eq.s32.totalorder %s29, 0
      %p92 = por %p90, %p91
      %p93 = scmp.ne.s32.totalorder %s81, %s82
      %p94 = scmp.eq.s32.totalorder %s30, 1
      %p95 = por %p93, %p94
      %p97 = scmp.ne.s32.totalorder %s82, %s96
      %p98 = scmp.eq.s32.totalorder %s30, 0
      %p99 = por %p97, %p98
      %s101 = sadd.s32 %s100, 1
      %p104 = scmp.eq.s32.totalorder %s24, 1
      %p105 = scmp.ne.s32.totalorder %s100, %s102
      %p106 = scmp.eq.s32.totalorder %s24, 0
      %p107 = por %p105, %p106
      %p108 = scmp.ne.s32.totalorder %s100, %s102
      %p109 = scmp.eq.s32.totalorder %s29, 1
      %p110 = por %p108, %p109
      %p111 = scmp.ne.s32.totalorder %s102, %s103
      %p112 = scmp.eq.s32.totalorder %s29, 0
      %p113 = por %p111, %p112
      %p114 = scmp.ne.s32.totalorder %s102, %s103
      %p115 = scmp.eq.s32.totalorder %s30, 1
      %p116 = por %p114, %p115
      %p118 = scmp.ne.s32.totalorder %s103, %s117
      %p119 = scmp.eq.s32.totalorder %s30, 0
      %p120 = por %p118, %p119
      %s122 = sadd.s32 %s121, 1
      %p125 = scmp.eq.s32.totalorder %s24, 1
      %p126 = scmp.ne.s32.totalorder %s121, %s123
      %p127 = scmp.eq.s32.totalorder %s24, 0
      %p128 = por %p126, %p127
      %p129 = scmp.ne.s32.totalorder %s121, %s123
      %p130 = scmp.eq.s32.totalorder %s29, 1
      %p131 = por %p129, %p130
      %p132 = scmp.ne.s32.totalorder %s123, %s124
      %p133 = scmp.eq.s32.totalorder %s29, 0
      %p134 = por %p132, %p133
      %p135 = scmp.ne.s32.totalorder %s123, %s124
      %p136 = scmp.eq.s32.totalorder %s30, 1
      %p137 = por %p135, %p136
      %p139 = scmp.ne.s32.totalorder %s124, %s138
      %p140 = scmp.eq.s32.totalorder %s30, 0
      %p141 = por %p139, %p140
      %s143 = sadd.s32 %s142, 1
      %p146 = scmp.eq.s32.totalorder %s24, 1
      %p147 = scmp.ne.s32.totalorder %s142, %s144
      %p148 = scmp.eq.s32.totalorder %s24, 0
      %p149 = por %p147, %p148
      %p150 = scmp.ne.s32.totalorder %s142, %s144
      %p151 = scmp.eq.s32.totalorder %s29, 1
      %p152 = por %p150, %p151
      %p153 = scmp.ne.s32.totalorder %s144, %s145
      %p154 = scmp.eq.s32.totalorder %s29, 0
      %p155 = por %p153, %p154
      %p156 = scmp.ne.s32.totalorder %s144, %s145
      %p157 = scmp.eq.s32.totalorder %s30, 1
      %p158 = por %p156, %p157
      %p160 = scmp.ne.s32.totalorder %s145, %s159
      %p161 = scmp.eq.s32.totalorder %s30, 0
      %p162 = por %p160, %p161
      %s164 = sadd.s32 %s163, 1
      %p167 = scmp.eq.s32.totalorder %s24, 1
      %p168 = scmp.ne.s32.totalorder %s163, %s165
      %p169 = scmp.eq.s32.totalorder %s24, 0
      %p170 = por %p168, %p169
      %p171 = scmp.ne.s32.totalorder %s163, %s165
      %p172 = scmp.eq.s32.totalorder %s29, 1
      %p173 = por %p171, %p172
      %p174 = scmp.ne.s32.totalorder %s165, %s166
      %p175 = scmp.eq.s32.totalorder %s29, 0
      %p176 = por %p174, %p175
      %p177 = scmp.ne.s32.totalorder %s165, %s166
      %p178 = scmp.eq.s32.totalorder %s30, 1
      %p179 = por %p177, %p178
      %p181 = scmp.ne.s32.totalorder %s166, %s180
      %p182 = scmp.eq.s32.totalorder %s30, 0
      %p183 = por %p181, %p182
      %s185 = sadd.s32 %s184, 1
      %p188 = scmp.eq.s32.totalorder %s24, 1
      %p189 = scmp.ne.s32.totalorder %s184, %s186
      %p190 = scmp.eq.s32.totalorder %s24, 0
      %p191 = por %p189, %p190
      %p192 = scmp.ne.s32.totalorder %s184, %s186
      %p193 = scmp.eq.s32.totalorder %s29, 1
      %p194 = por %p192, %p193
      %p195 = scmp.ne.s32.totalorder %s186, %s187
      %p196 = scmp.eq.s32.totalorder %s29, 0
      %p197 = por %p195, %p196
      %p198 = scmp.ne.s32.totalorder %s186, %s187
      %p199 = scmp.eq.s32.totalorder %s30, 1
      %p200 = por %p198, %p199
      %p202 = scmp.ne.s32.totalorder %s187, %s201
      %p203 = scmp.eq.s32.totalorder %s30, 0
      %p204 = por %p202, %p203
      %s206 = sadd.s32 %s205, 1
      %p209 = scmp.eq.s32.totalorder %s24, 1
      %p210 = scmp.ne.s32.totalorder %s205, %s207
      %p211 = scmp.eq.s32.totalorder %s24, 0
      %p212 = por %p210, %p211
      %p213 = scmp.ne.s32.totalorder %s205, %s207
      %p214 = scmp.eq.s32.totalorder %s29, 1
      %p215 = por %p213, %p214
      %p216 = scmp.ne.s32.totalorder %s207, %s208
      %p217 = scmp.eq.s32.totalorder %s29, 0
      %p218 = por %p216, %p217
      %p219 = scmp.ne.s32.totalorder %s207, %s208
      %p220 = scmp.eq.s32.totalorder %s30, 1
      %p221 = por %p219, %p220
      %p223 = scmp.ne.s32.totalorder %s208, %s222
      %p224 = scmp.eq.s32.totalorder %s30, 0
      %p225 = por %p223, %p224
      %s226 = ssub.s32 %s24, %s31
      %p227 = scmp.eq.s32.totalorder %s226, 0
      %s229 = sadd.s32 %s228, 1
      %s230 = scalar_select %p227, %s228, %s229
      %p233 = pneg %p227
      %p234 = scmp.eq.s32.totalorder %s24, 1
      %p235 = por %p233, %p234
      %p236 = scmp.ne.s32.totalorder %s228, %s231
      %p237 = scmp.eq.s32.totalorder %s24, 0
      %p238 = por %p236, %p237
      %p239 = scmp.ne.s32.totalorder %s228, %s231
      %p240 = scmp.eq.s32.totalorder %s29, 1
      %p241 = por %p239, %p240
      %p242 = scmp.ne.s32.totalorder %s231, %s232
      %p243 = scmp.eq.s32.totalorder %s29, 0
      %p244 = por %p242, %p243
      %p245 = scmp.ne.s32.totalorder %s231, %s232
      %p246 = scmp.eq.s32.totalorder %s30, 1
      %p247 = por %p245, %p246
      %p249 = scmp.ne.s32.totalorder %s232, %s248
      %p250 = scmp.eq.s32.totalorder %s30, 0
      %p251 = por %p249, %p250
      %p252 = scmp.le.s32.totalorder 1, %s24
      %p253 = scmp.lt.s32.totalorder %s24, 3
      %p254 = pnand %p252, %p253
      %p255 = pneg %p254
      // Predicated region
      $region9: #{tpu_custom_call.1} parent=5 // pred_check
        _
      $region10: #{tpu_custom_call.1} parent=5 // pred_check_branch
        %257 = sbr.rel (%p254) target = $region12
      $region11: #{tpu_custom_call.1} parent=5 // pred_region
        %s258 = ssub.s32 %s24, 1
        // Predicated region
        $region13: #{tpu_custom_call.1} parent=11 // pred_check
          %p259 = pneg %p71
        $region14: #{tpu_custom_call.1} parent=11 // pred_check_branch
          %261 = sbr.rel (%p259) target = $region16
        $region15: #{tpu_custom_call.1} parent=11 // pred_region
          %s263 = ssub.s32 16384, 16384
          %264 = vsyncadd [#allocation7], %s263
          %s265 = sshll.u32 [#allocation6], 4
          %s266 = int_to_ptr.vmem [resolvable:$true] %s265
          %271 = dma.hbm_to_vmem [thread:$0]  %s1, 16384, %s266, [#allocation7], 128, 128, 8
        $region16: #{tpu_custom_call.1} parent=11 // pred_fallthru
          _
        // Predicated region
        $region17: #{tpu_custom_call.1} parent=11 // pred_check
          %p272 = pneg %p92
        $region18: #{tpu_custom_call.1} parent=11 // pred_check_branch
          %274 = sbr.rel (%p272) target = $region20
        $region19: #{tpu_custom_call.1} parent=11 // pred_region
          _
        $region20: #{tpu_custom_call.1} parent=11 // pred_fallthru
          _
        // Predicated region
        $region21: #{tpu_custom_call.1} parent=11 // pred_check
          %p275 = pneg %p113
        $region22: #{tpu_custom_call.1} parent=11 // pred_check_branch
          %277 = sbr.rel (%p275) target = $region24
        $region23: #{tpu_custom_call.1} parent=11 // pred_region
          %s279 = ssub.s32 2048, 2048
          %280 = vsyncadd [#allocation7], %s279
          %s281 = sshll.u32 [#allocation8], 4
          %s282 = int_to_ptr.vmem [resolvable:$true] %s281
          %287 = dma.hbm_to_vmem [thread:$0]  %s3, 2048, %s282, [#allocation7], 64, 64, 4
        $region24: #{tpu_custom_call.1} parent=11 // pred_fallthru
          _
        // Predicated region
        $region25: #{tpu_custom_call.1} parent=11 // pred_check
          %p288 = pneg %p134
        $region26: #{tpu_custom_call.1} parent=11 // pred_check_branch
          %290 = sbr.rel (%p288) target = $region28
        $region27: #{tpu_custom_call.1} parent=11 // pred_region
          _
        $region28: #{tpu_custom_call.1} parent=11 // pred_fallthru
          _
        // Predicated region
        $region29: #{tpu_custom_call.1} parent=11 // pred_check
          %p291 = pneg %p155
        $region30: #{tpu_custom_call.1} parent=11 // pred_check_branch
          %293 = sbr.rel (%p291) target = $region32
        $region31: #{tpu_custom_call.1} parent=11 // pred_region
          _
        $region32: #{tpu_custom_call.1} parent=11 // pred_fallthru
          _
        // Predicated region
        $region33: #{tpu_custom_call.1} parent=11 // pred_check
          %p294 = pneg %p176
        $region34: #{tpu_custom_call.1} parent=11 // pred_check_branch
          %296 = sbr.rel (%p294) target = $region36
        $region35: #{tpu_custom_call.1} parent=11 // pred_region
          _
        $region36: #{tpu_custom_call.1} parent=11 // pred_fallthru
          _
        // Predicated region
        $region37: #{tpu_custom_call.1} parent=11 // pred_check
          %p297 = pneg %p197
        $region38: #{tpu_custom_call.1} parent=11 // pred_check_branch
          %299 = sbr.rel (%p297) target = $region40
        $region39: #{tpu_custom_call.1} parent=11 // pred_region
          _
        $region40: #{tpu_custom_call.1} parent=11 // pred_fallthru
          _
        // Predicated region
        $region41: #{tpu_custom_call.1} parent=11 // pred_check
          %p300 = pneg %p218
        $region42: #{tpu_custom_call.1} parent=11 // pred_check_branch
          %302 = sbr.rel (%p300) target = $region44
        $region43: #{tpu_custom_call.1} parent=11 // pred_region
          _
        $region44: #{tpu_custom_call.1} parent=11 // pred_fallthru
          _
      $region12: #{tpu_custom_call.1} parent=5 // pred_fallthru
        _
      %p303 = scmp.lt.s32.totalorder %s24, 2
      // Predicated region
      $region45: #{tpu_custom_call.1} parent=5 // pred_check
        %p304 = pneg %p303
      $region46: #{tpu_custom_call.1} parent=5 // pred_check_branch
        %306 = sbr.rel (%p304) target = $region48
      $region47: #{tpu_custom_call.1} parent=5 // pred_region
        // Predicated region
        $region49: #{tpu_custom_call.1} parent=47 // pred_check
          %p307 = pneg %p44
        $region50: #{tpu_custom_call.1} parent=47 // pred_check_branch
          %309 = sbr.rel (%p307) target = $region52
        $region51: #{tpu_custom_call.1} parent=47 // pred_region
          %s310 = sand.u32 %s34, 1
          %s311 = scalar_lea.sflag [#allocation4], %s310
          %s312 = sand.u32 %s34, 1
          %s313 = smul.addr %s312, 64
          %s314 = scalar_lea.vmem [#allocation3], %s313
          %s315 = smul.u32 2, %s24
          %s317 = ssub.s32 1024, 1024
          %318 = vsyncadd %s311, %s317
          %s319 = smul.addr %s315, 8
          %s320 = smul.addr %s319, 64
          %s321 = scalar_lea.hbm %s0, %s320
          %s322 = sshll.u32 %s314, 4
          %s323 = int_to_ptr.vmem [resolvable:$true] %s322
          %328 = dma.hbm_to_vmem [thread:$0]  %s321, 1024, %s323, %s311, 512, 512, 32
        $region52: #{tpu_custom_call.1} parent=47 // pred_fallthru
          _
      $region48: #{tpu_custom_call.1} parent=5 // pred_fallthru
        _
      %p329 = scmp.le.s32.totalorder 1, %s24
      %p330 = scmp.lt.s32.totalorder %s24, 3
      %p331 = pnand %p329, %p330
      %p332 = pneg %p331
      // Predicated region
      $region53: #{tpu_custom_call.1} parent=5 // pred_check
        _
      $region54: #{tpu_custom_call.1} parent=5 // pred_check_branch
        %334 = sbr.rel (%p331) target = $region56
      $region55: #{tpu_custom_call.1} parent=5 // pred_region
        %s335 = ssub.s32 %s24, 1
        %s336 = sand.u32 %s37, 1
        %s337 = scalar_lea.sflag [#allocation4], %s336
        %s338 = sand.u32 %s37, 1
        %s339 = smul.addr %s338, 64
        %s340 = scalar_lea.vmem [#allocation3], %s339
        // Predicated region
        $region57: #{tpu_custom_call.1} parent=55 // pred_check
          %p341 = pneg %p50
        $region58: #{tpu_custom_call.1} parent=55 // pred_check_branch
          %343 = sbr.rel (%p341) target = $region60
        $region59: #{tpu_custom_call.1} parent=55 // pred_region
          %344 = dma.done %s337, 1024
        $region60: #{tpu_custom_call.1} parent=55 // pred_fallthru
          _
        // Predicated region
        $region61: #{tpu_custom_call.1} parent=55 // pred_check
          %p345 = pneg %p71
        $region62: #{tpu_custom_call.1} parent=55 // pred_check_branch
          %347 = sbr.rel (%p345) target = $region64
        $region63: #{tpu_custom_call.1} parent=55 // pred_region
          %348 = dma.done [#allocation7], 16384
        $region64: #{tpu_custom_call.1} parent=55 // pred_fallthru
          _
        // Predicated region
        $region65: #{tpu_custom_call.1} parent=55 // pred_check
          %p349 = pneg %p113
        $region66: #{tpu_custom_call.1} parent=55 // pred_check_branch
          %351 = sbr.rel (%p349) target = $region68
        $region67: #{tpu_custom_call.1} parent=55 // pred_region
          %352 = dma.done [#allocation7], 2048
        $region68: #{tpu_custom_call.1} parent=55 // pred_fallthru
          _
        %s353 = sand.u32 %s37, 1
        %s354 = scalar_lea.sflag [#allocation4], %s353
        %s355 = sand.u32 %s37, 1
        %s356 = smul.addr %s355, 64
        %s357 = scalar_lea.vmem [#allocation3], %s356
        %p358 = pneg %p50
        %p359 = pneg %p47
        %p360 = pneg %p71
        %p361 = pneg %p68
        %p362 = pneg %p92
        %p363 = pneg %p89
        %p364 = pneg %p113
        %p365 = pneg %p110
        %p366 = pneg %p134
        %p367 = pneg %p131
        %p368 = pneg %p155
        %p369 = pneg %p152
        %p370 = pneg %p176
        %p371 = pneg %p173
        %p372 = pneg %p197
        %p373 = pneg %p194
        %p374 = pneg %p218
        %p375 = pneg %p215
        %p376 = pneg %p244
        %p377 = pneg %p241
        %s378 = sand.u32 %s231, 1
        %s379 = scalar_lea.sflag [#allocation5], %s378
        %s380 = sand.u32 %s231, 1
        %s381 = smul.addr %s380, 8
        %s382 = scalar_lea.vmem [#allocation9], %s381
        %s383 = smul.u32 2, %s29
        %v385 = vld [vmem:[%s340] sm:$0xff]
        %v386 = vld [vmem:[%s340 + $0x8] sm:$0xff]
        %v387 = vld [vmem:[%s340 + $0x10] sm:$0xff]
        %v388 = vld [vmem:[%s340 + $0x18] sm:$0xff]
        %v389 = vld [vmem:[%s340 + $0x20] sm:$0xff]
        %v390 = vld [vmem:[%s340 + $0x28] sm:$0xff]
        %v391 = vld [vmem:[%s340 + $0x30] sm:$0xff]
        %v392 = vld [vmem:[%s340 + $0x38] sm:$0xff]
        %v393 = vunpack.c.l.bf16 %v385
        %v394 = vunpack.c.h.bf16 %v385
        %v395 = vunpack.c.l.bf16 %v386
        %v396 = vunpack.c.h.bf16 %v386
        %v397 = vunpack.c.l.bf16 %v387
        %v398 = vunpack.c.h.bf16 %v387
        %v399 = vunpack.c.l.bf16 %v388
        %v400 = vunpack.c.h.bf16 %v388
        %v401 = vunpack.c.l.bf16 %v389
        %v402 = vunpack.c.h.bf16 %v389
        %v403 = vunpack.c.l.bf16 %v390
        %v404 = vunpack.c.h.bf16 %v390
        %v405 = vunpack.c.l.bf16 %v391
        %v406 = vunpack.c.h.bf16 %v391
        %v407 = vunpack.c.l.bf16 %v392
        %v408 = vunpack.c.h.bf16 %v392
        %v409 = vadd.f32 %v393, %v394
        %v410 = vadd.f32 %v409, %v395
        %v411 = vadd.f32 %v410, %v396
        %v412 = vadd.f32 %v411, %v397
        %v413 = vadd.f32 %v412, %v398
        %v414 = vadd.f32 %v413, %v399
        %v415 = vadd.f32 %v414, %v400
        %416 = vadd.xlane.f32.xlu0 %v415
        %v417 = vpop.xlane.xlu0 %416
        %v418 = vadd.f32 %v401, %v402
        %v419 = vadd.f32 %v418, %v403
        %v420 = vadd.f32 %v419, %v404
        %v421 = vadd.f32 %v420, %v405
        %v422 = vadd.f32 %v421, %v406
        %v423 = vadd.f32 %v422, %v407
        %v424 = vadd.f32 %v423, %v408
        %425 = vadd.xlane.f32.xlu0 %v424
        %v426 = vpop.xlane.xlu0 %425
        %v427 = vrcp.pop 1024.0
        %v428 = vmul.f32 %v417, %v427
        %v429 = vmul.f32 %v426, %v427
        %v430 = vmul.f32 %v393, %v393
        %v431 = vmul.f32 %v394, %v394
        %v432 = vmul.f32 %v395, %v395
        %v433 = vmul.f32 %v396, %v396
        %v434 = vmul.f32 %v397, %v397
        %v435 = vmul.f32 %v398, %v398
        %v436 = vmul.f32 %v399, %v399
        %v437 = vmul.f32 %v400, %v400
        %v438 = vmul.f32 %v401, %v401
        %v439 = vmul.f32 %v402, %v402
        %v440 = vmul.f32 %v403, %v403
        %v441 = vmul.f32 %v404, %v404
        %v442 = vmul.f32 %v405, %v405
        %v443 = vmul.f32 %v406, %v406
        %v444 = vmul.f32 %v407, %v407
        %v445 = vmul.f32 %v408, %v408
        %v446 = vadd.f32 %v430, %v431
        %v447 = vadd.f32 %v446, %v432
        %v448 = vadd.f32 %v447, %v433
        %v449 = vadd.f32 %v448, %v434
        %v450 = vadd.f32 %v449, %v435
        %v451 = vadd.f32 %v450, %v436
        %v452 = vadd.f32 %v451, %v437
        %453 = vadd.xlane.f32.xlu0 %v452
        %v454 = vpop.xlane.xlu0 %453
        %v455 = vadd.f32 %v438, %v439
        %v456 = vadd.f32 %v455, %v440
        %v457 = vadd.f32 %v456, %v441
        %v458 = vadd.f32 %v457, %v442
        %v459 = vadd.f32 %v458, %v443
        %v460 = vadd.f32 %v459, %v444
        %v461 = vadd.f32 %v460, %v445
        %462 = vadd.xlane.f32.xlu0 %v461
        %v463 = vpop.xlane.xlu0 %462
        %v464 = vmul.f32 %v454, %v427
        %v465 = vmul.f32 %v463, %v427
        %v466 = vmul.f32 %v428, %v428
        %v467 = vmul.f32 %v429, %v429
        %v468 = vsub.f32 %v464, %v466
        %v469 = vsub.f32 %v465, %v467
        %v470 = vmax.f32 %v468, 0.0
        %v471 = vmax.f32 %v469, 0.0
        %v472 = vadd.f32 %v470, 1e-05
        %v473 = vadd.f32 %v471, 1e-05
        %v474 = vrsqrt.pop %v472
        %v475 = vrsqrt.pop %v473
        %v476 = vpack.c.bf16 %v429, %v428
        %v479 = vunpack.c.l.s4 839922192
        %v480 = vunpack.c.0.s8 %v479
        %v481 = vlaneseq
        %v482 = vshrl.u32 %v481, 7
        %v483 = vsub.s32 %v480, %v482
        %v484 = vrot.slane %v476, %v483
        %v486 = vunpack.c.l.s4 1985246804
        %v487 = vunpack.c.0.s8 %v486
        %v488 = vlaneseq
        %v489 = vshrl.u32 %v488, 7
        %v490 = vsub.s32 %v487, %v489
        %v491 = vrot.slane %v476, %v490
        %v494 = vsub.bf16 %v385, %v484
        %v495 = vsub.bf16 %v386, %v484
        %v496 = vsub.bf16 %v387, %v484
        %v497 = vsub.bf16 %v388, %v484
        %v498 = vsub.bf16 %v389, %v491
        %v499 = vsub.bf16 %v390, %v491
        %v500 = vsub.bf16 %v391, %v491
        %v501 = vsub.bf16 %v392, %v491
        %v502 = vld [vmem:[#allocation6] sm:$0xff]
        %v503 = vld [vmem:[#allocation6 + $0x8] sm:$0xff]
        %v504 = vld [vmem:[#allocation6 + $0x10] sm:$0xff]
        %v505 = vld [vmem:[#allocation6 + $0x18] sm:$0xff]
        %v506 = vld [vmem:[#allocation6 + $0x20] sm:$0xff]
        %v507 = vld [vmem:[#allocation6 + $0x28] sm:$0xff]
        %v508 = vld [vmem:[#allocation6 + $0x30] sm:$0xff]
        %v509 = vld [vmem:[#allocation6 + $0x38] sm:$0xff]
        %v510 = vld [vmem:[#allocation6 + $0x40] sm:$0xff]
        %v511 = vld [vmem:[#allocation6 + $0x48] sm:$0xff]
        %v512 = vld [vmem:[#allocation6 + $0x50] sm:$0xff]
        %v513 = vld [vmem:[#allocation6 + $0x58] sm:$0xff]
        %v514 = vld [vmem:[#allocation6 + $0x60] sm:$0xff]
        %v515 = vld [vmem:[#allocation6 + $0x68] sm:$0xff]
        %v516 = vld [vmem:[#allocation6 + $0x70] sm:$0xff]
        %v517 = vld [vmem:[#allocation6 + $0x78] sm:$0xff]
        %v518 = vld [vmem:[#allocation6 + $0x80] sm:$0xff]
        %v519 = vld [vmem:[#allocation6 + $0x88] sm:$0xff]
        %v520 = vld [vmem:[#allocation6 + $0x90] sm:$0xff]
        %v521 = vld [vmem:[#allocation6 + $0x98] sm:$0xff]
        %v522 = vld [vmem:[#allocation6 + $0xa0] sm:$0xff]
        %v523 = vld [vmem:[#allocation6 + $0xa8] sm:$0xff]
        %v524 = vld [vmem:[#allocation6 + $0xb0] sm:$0xff]
        %v525 = vld [vmem:[#allocation6 + $0xb8] sm:$0xff]
        %v526 = vld [vmem:[#allocation6 + $0xc0] sm:$0xff]
        %v527 = vld [vmem:[#allocation6 + $0xc8] sm:$0xff]
        %v528 = vld [vmem:[#allocation6 + $0xd0] sm:$0xff]
        %v529 = vld [vmem:[#allocation6 + $0xd8] sm:$0xff]
        %v530 = vld [vmem:[#allocation6 + $0xe0] sm:$0xff]
        %v531 = vld [vmem:[#allocation6 + $0xe8] sm:$0xff]
        %v532 = vld [vmem:[#allocation6 + $0xf0] sm:$0xff]
        %v533 = vld [vmem:[#allocation6 + $0xf8] sm:$0xff]
        %v534 = vld [vmem:[#allocation6 + $0x100] sm:$0xff]
        %v535 = vld [vmem:[#allocation6 + $0x108] sm:$0xff]
        %v536 = vld [vmem:[#allocation6 + $0x110] sm:$0xff]
        %v537 = vld [vmem:[#allocation6 + $0x118] sm:$0xff]
        %v538 = vld [vmem:[#allocation6 + $0x120] sm:$0xff]
        %v539 = vld [vmem:[#allocation6 + $0x128] sm:$0xff]
        %v540 = vld [vmem:[#allocation6 + $0x130] sm:$0xff]
        %v541 = vld [vmem:[#allocation6 + $0x138] sm:$0xff]
        %v542 = vld [vmem:[#allocation6 + $0x140] sm:$0xff]
        %v543 = vld [vmem:[#allocation6 + $0x148] sm:$0xff]
        %v544 = vld [vmem:[#allocation6 + $0x150] sm:$0xff]
        %v545 = vld [vmem:[#allocation6 + $0x158] sm:$0xff]
        %v546 = vld [vmem:[#allocation6 + $0x160] sm:$0xff]
        %v547 = vld [vmem:[#allocation6 + $0x168] sm:$0xff]
        %v548 = vld [vmem:[#allocation6 + $0x170] sm:$0xff]
        %v549 = vld [vmem:[#allocation6 + $0x178] sm:$0xff]
        %v550 = vld [vmem:[#allocation6 + $0x180] sm:$0xff]
        %v551 = vld [vmem:[#allocation6 + $0x188] sm:$0xff]
        %v552 = vld [vmem:[#allocation6 + $0x190] sm:$0xff]
        %v553 = vld [vmem:[#allocation6 + $0x198] sm:$0xff]
        %v554 = vld [vmem:[#allocation6 + $0x1a0] sm:$0xff]
        %v555 = vld [vmem:[#allocation6 + $0x1a8] sm:$0xff]
        %v556 = vld [vmem:[#allocation6 + $0x1b0] sm:$0xff]
        %v557 = vld [vmem:[#allocation6 + $0x1b8] sm:$0xff]
        %v558 = vld [vmem:[#allocation6 + $0x1c0] sm:$0xff]
        %v559 = vld [vmem:[#allocation6 + $0x1c8] sm:$0xff]
        %v560 = vld [vmem:[#allocation6 + $0x1d0] sm:$0xff]
        %v561 = vld [vmem:[#allocation6 + $0x1d8] sm:$0xff]
        %v562 = vld [vmem:[#allocation6 + $0x1e0] sm:$0xff]
        %v563 = vld [vmem:[#allocation6 + $0x1e8] sm:$0xff]
        %v564 = vld [vmem:[#allocation6 + $0x1f0] sm:$0xff]
        %v565 = vld [vmem:[#allocation6 + $0x1f8] sm:$0xff]
        %v566 = vld [vmem:[#allocation6 + $0x200] sm:$0xff]
        %v567 = vld [vmem:[#allocation6 + $0x208] sm:$0xff]
        %v568 = vld [vmem:[#allocation6 + $0x210] sm:$0xff]
        %v569 = vld [vmem:[#allocation6 + $0x218] sm:$0xff]
        %v570 = vld [vmem:[#allocation6 + $0x220] sm:$0xff]
        %v571 = vld [vmem:[#allocation6 + $0x228] sm:$0xff]
        %v572 = vld [vmem:[#allocation6 + $0x230] sm:$0xff]
        %v573 = vld [vmem:[#allocation6 + $0x238] sm:$0xff]
        %v574 = vld [vmem:[#allocation6 + $0x240] sm:$0xff]
        %v575 = vld [vmem:[#allocation6 + $0x248] sm:$0xff]
        %v576 = vld [vmem:[#allocation6 + $0x250] sm:$0xff]
        %v577 = vld [vmem:[#allocation6 + $0x258] sm:$0xff]
        %v578 = vld [vmem:[#allocation6 + $0x260] sm:$0xff]
        %v579 = vld [vmem:[#allocation6 + $0x268] sm:$0xff]
        %v580 = vld [vmem:[#allocation6 + $0x270] sm:$0xff]
        %v581 = vld [vmem:[#allocation6 + $0x278] sm:$0xff]
        %v582 = vld [vmem:[#allocation6 + $0x280] sm:$0xff]
        %v583 = vld [vmem:[#allocation6 + $0x288] sm:$0xff]
        %v584 = vld [vmem:[#allocation6 + $0x290] sm:$0xff]
        %v585 = vld [vmem:[#allocation6 + $0x298] sm:$0xff]
        %v586 = vld [vmem:[#allocation6 + $0x2a0] sm:$0xff]
        %v587 = vld [vmem:[#allocation6 + $0x2a8] sm:$0xff]
        %v588 = vld [vmem:[#allocation6 + $0x2b0] sm:$0xff]
        %v589 = vld [vmem:[#allocation6 + $0x2b8] sm:$0xff]
        %v590 = vld [vmem:[#allocation6 + $0x2c0] sm:$0xff]
        %v591 = vld [vmem:[#allocation6 + $0x2c8] sm:$0xff]
        %v592 = vld [vmem:[#allocation6 + $0x2d0] sm:$0xff]
        %v593 = vld [vmem:[#allocation6 + $0x2d8] sm:$0xff]
        %v594 = vld [vmem:[#allocation6 + $0x2e0] sm:$0xff]
        %v595 = vld [vmem:[#allocation6 + $0x2e8] sm:$0xff]
        %v596 = vld [vmem:[#allocation6 + $0x2f0] sm:$0xff]
        %v597 = vld [vmem:[#allocation6 + $0x2f8] sm:$0xff]
        %v598 = vld [vmem:[#allocation6 + $0x300] sm:$0xff]
        %v599 = vld [vmem:[#allocation6 + $0x308] sm:$0xff]
        %v600 = vld [vmem:[#allocation6 + $0x310] sm:$0xff]
        %v601 = vld [vmem:[#allocation6 + $0x318] sm:$0xff]
        %v602 = vld [vmem:[#allocation6 + $0x320] sm:$0xff]
        %v603 = vld [vmem:[#allocation6 + $0x328] sm:$0xff]
        %v604 = vld [vmem:[#allocation6 + $0x330] sm:$0xff]
        %v605 = vld [vmem:[#allocation6 + $0x338] sm:$0xff]
        %v606 = vld [vmem:[#allocation6 + $0x340] sm:$0xff]
        %v607 = vld [vmem:[#allocation6 + $0x348] sm:$0xff]
        %v608 = vld [vmem:[#allocation6 + $0x350] sm:$0xff]
        %v609 = vld [vmem:[#allocation6 + $0x358] sm:$0xff]
        %v610 = vld [vmem:[#allocation6 + $0x360] sm:$0xff]
        %v611 = vld [vmem:[#allocation6 + $0x368] sm:$0xff]
        %v612 = vld [vmem:[#allocation6 + $0x370] sm:$0xff]
        %v613 = vld [vmem:[#allocation6 + $0x378] sm:$0xff]
        %v614 = vld [vmem:[#allocation6 + $0x380] sm:$0xff]
        %v615 = vld [vmem:[#allocation6 + $0x388] sm:$0xff]
        %v616 = vld [vmem:[#allocation6 + $0x390] sm:$0xff]
        %v617 = vld [vmem:[#allocation6 + $0x398] sm:$0xff]
        %v618 = vld [vmem:[#allocation6 + $0x3a0] sm:$0xff]
        %v619 = vld [vmem:[#allocation6 + $0x3a8] sm:$0xff]
        %v620 = vld [vmem:[#allocation6 + $0x3b0] sm:$0xff]
        %v621 = vld [vmem:[#allocation6 + $0x3b8] sm:$0xff]
        %v622 = vld [vmem:[#allocation6 + $0x3c0] sm:$0xff]
        %v623 = vld [vmem:[#allocation6 + $0x3c8] sm:$0xff]
        %v624 = vld [vmem:[#allocation6 + $0x3d0] sm:$0xff]
        %v625 = vld [vmem:[#allocation6 + $0x3d8] sm:$0xff]
        %v626 = vld [vmem:[#allocation6 + $0x3e0] sm:$0xff]
        %v627 = vld [vmem:[#allocation6 + $0x3e8] sm:$0xff]
        %v628 = vld [vmem:[#allocation6 + $0x3f0] sm:$0xff]
        %v629 = vld [vmem:[#allocation6 + $0x3f8] sm:$0xff]
        %v638 = vunpack.c.l.b16 %v494
        %v639 = vunpack.c.h.b16 %v494
        %v640 = vunpack.c.l.b16 %v495
        %v641 = vunpack.c.h.b16 %v495
        %v642 = vunpack.c.l.b16 %v496
        %v643 = vunpack.c.h.b16 %v496
        %v644 = vunpack.c.l.b16 %v497
        %v645 = vunpack.c.h.b16 %v497
        %v646 = vunpack.c.l.b16 %v498
        %v647 = vunpack.c.h.b16 %v498
        %v648 = vunpack.c.l.b16 %v499
        %v649 = vunpack.c.h.b16 %v499
        %v650 = vunpack.c.l.b16 %v500
        %v651 = vunpack.c.h.b16 %v500
        %v652 = vunpack.c.l.b16 %v501
        %v653 = vunpack.c.h.b16 %v501
        %v654 = vpack.c.b16 %v646, %v638
        %v655 = vpack.c.b16 %v647, %v639
        %v656 = vpack.c.b16 %v648, %v640
        %v657 = vpack.c.b16 %v649, %v641
        %v658 = vpack.c.b16 %v650, %v642
        %v659 = vpack.c.b16 %v651, %v643
        %v660 = vpack.c.b16 %v652, %v644
        %v661 = vpack.c.b16 %v653, %v645
        %v798 = vunpack.c.l.b16 %v502
        %v799 = vunpack.c.h.b16 %v502
        %v800 = vunpack.c.l.b16 %v503
        %v801 = vunpack.c.h.b16 %v503
        %v802 = vunpack.c.l.b16 %v504
        %v803 = vunpack.c.h.b16 %v504
        %v804 = vunpack.c.l.b16 %v505
        %v805 = vunpack.c.h.b16 %v505
        %v806 = vunpack.c.l.b16 %v506
        %v807 = vunpack.c.h.b16 %v506
        %v808 = vunpack.c.l.b16 %v507
        %v809 = vunpack.c.h.b16 %v507
        %v810 = vunpack.c.l.b16 %v508
        %v811 = vunpack.c.h.b16 %v508
        %v812 = vunpack.c.l.b16 %v509
        %v813 = vunpack.c.h.b16 %v509
        %v814 = vunpack.c.l.b16 %v510
        %v815 = vunpack.c.h.b16 %v510
        %v816 = vunpack.c.l.b16 %v511
        %v817 = vunpack.c.h.b16 %v511
        %v818 = vunpack.c.l.b16 %v512
        %v819 = vunpack.c.h.b16 %v512
        %v820 = vunpack.c.l.b16 %v513
        %v821 = vunpack.c.h.b16 %v513
        %v822 = vunpack.c.l.b16 %v514
        %v823 = vunpack.c.h.b16 %v514
        %v824 = vunpack.c.l.b16 %v515
        %v825 = vunpack.c.h.b16 %v515
        %v826 = vunpack.c.l.b16 %v516
        %v827 = vunpack.c.h.b16 %v516
        %v828 = vunpack.c.l.b16 %v517
        %v829 = vunpack.c.h.b16 %v517
        %v830 = vunpack.c.l.b16 %v518
        %v831 = vunpack.c.h.b16 %v518
        %v832 = vunpack.c.l.b16 %v519
        %v833 = vunpack.c.h.b16 %v519
        %v834 = vunpack.c.l.b16 %v520
        %v835 = vunpack.c.h.b16 %v520
        %v836 = vunpack.c.l.b16 %v521
        %v837 = vunpack.c.h.b16 %v521
        %v838 = vunpack.c.l.b16 %v522
        %v839 = vunpack.c.h.b16 %v522
        %v840 = vunpack.c.l.b16 %v523
        %v841 = vunpack.c.h.b16 %v523
        %v842 = vunpack.c.l.b16 %v524
        %v843 = vunpack.c.h.b16 %v524
        %v844 = vunpack.c.l.b16 %v525
        %v845 = vunpack.c.h.b16 %v525
        %v846 = vunpack.c.l.b16 %v526
        %v847 = vunpack.c.h.b16 %v526
        %v848 = vunpack.c.l.b16 %v527
        %v849 = vunpack.c.h.b16 %v527
        %v850 = vunpack.c.l.b16 %v528
        %v851 = vunpack.c.h.b16 %v528
        %v852 = vunpack.c.l.b16 %v529
        %v853 = vunpack.c.h.b16 %v529
        %v854 = vunpack.c.l.b16 %v530
        %v855 = vunpack.c.h.b16 %v530
        %v856 = vunpack.c.l.b16 %v531
        %v857 = vunpack.c.h.b16 %v531
        %v858 = vunpack.c.l.b16 %v532
        %v859 = vunpack.c.h.b16 %v532
        %v860 = vunpack.c.l.b16 %v533
        %v861 = vunpack.c.h.b16 %v533
        %v862 = vunpack.c.l.b16 %v534
        %v863 = vunpack.c.h.b16 %v534
        %v864 = vunpack.c.l.b16 %v535
        %v865 = vunpack.c.h.b16 %v535
        %v866 = vunpack.c.l.b16 %v536
        %v867 = vunpack.c.h.b16 %v536
        %v868 = vunpack.c.l.b16 %v537
        %v869 = vunpack.c.h.b16 %v537
        %v870 = vunpack.c.l.b16 %v538
        %v871 = vunpack.c.h.b16 %v538
        %v872 = vunpack.c.l.b16 %v539
        %v873 = vunpack.c.h.b16 %v539
        %v874 = vunpack.c.l.b16 %v540
        %v875 = vunpack.c.h.b16 %v540
        %v876 = vunpack.c.l.b16 %v541
        %v877 = vunpack.c.h.b16 %v541
        %v878 = vunpack.c.l.b16 %v542
        %v879 = vunpack.c.h.b16 %v542
        %v880 = vunpack.c.l.b16 %v543
        %v881 = vunpack.c.h.b16 %v543
        %v882 = vunpack.c.l.b16 %v544
        %v883 = vunpack.c.h.b16 %v544
        %v884 = vunpack.c.l.b16 %v545
        %v885 = vunpack.c.h.b16 %v545
        %v886 = vunpack.c.l.b16 %v546
        %v887 = vunpack.c.h.b16 %v546
        %v888 = vunpack.c.l.b16 %v547
        %v889 = vunpack.c.h.b16 %v547
        %v890 = vunpack.c.l.b16 %v548
        %v891 = vunpack.c.h.b16 %v548
        %v892 = vunpack.c.l.b16 %v549
        %v893 = vunpack.c.h.b16 %v549
        %v894 = vunpack.c.l.b16 %v550
        %v895 = vunpack.c.h.b16 %v550
        %v896 = vunpack.c.l.b16 %v551
        %v897 = vunpack.c.h.b16 %v551
        %v898 = vunpack.c.l.b16 %v552
        %v899 = vunpack.c.h.b16 %v552
        %v900 = vunpack.c.l.b16 %v553
        %v901 = vunpack.c.h.b16 %v553
        %v902 = vunpack.c.l.b16 %v554
        %v903 = vunpack.c.h.b16 %v554
        %v904 = vunpack.c.l.b16 %v555
        %v905 = vunpack.c.h.b16 %v555
        %v906 = vunpack.c.l.b16 %v556
        %v907 = vunpack.c.h.b16 %v556
        %v908 = vunpack.c.l.b16 %v557
        %v909 = vunpack.c.h.b16 %v557
        %v910 = vunpack.c.l.b16 %v558
        %v911 = vunpack.c.h.b16 %v558
        %v912 = vunpack.c.l.b16 %v559
        %v913 = vunpack.c.h.b16 %v559
        %v914 = vunpack.c.l.b16 %v560
        %v915 = vunpack.c.h.b16 %v560
        %v916 = vunpack.c.l.b16 %v561
        %v917 = vunpack.c.h.b16 %v561
        %v918 = vunpack.c.l.b16 %v562
        %v919 = vunpack.c.h.b16 %v562
        %v920 = vunpack.c.l.b16 %v563
        %v921 = vunpack.c.h.b16 %v563
        %v922 = vunpack.c.l.b16 %v564
        %v923 = vunpack.c.h.b16 %v564
        %v924 = vunpack.c.l.b16 %v565
        %v925 = vunpack.c.h.b16 %v565
        %v926 = vunpack.c.l.b16 %v566
        %v927 = vunpack.c.h.b16 %v566
        %v928 = vunpack.c.l.b16 %v567
        %v929 = vunpack.c.h.b16 %v567
        %v930 = vunpack.c.l.b16 %v568
        %v931 = vunpack.c.h.b16 %v568
        %v932 = vunpack.c.l.b16 %v569
        %v933 = vunpack.c.h.b16 %v569
        %v934 = vunpack.c.l.b16 %v570
        %v935 = vunpack.c.h.b16 %v570
        %v936 = vunpack.c.l.b16 %v571
        %v937 = vunpack.c.h.b16 %v571
        %v938 = vunpack.c.l.b16 %v572
        %v939 = vunpack.c.h.b16 %v572
        %v940 = vunpack.c.l.b16 %v573
        %v941 = vunpack.c.h.b16 %v573
        %v942 = vunpack.c.l.b16 %v574
        %v943 = vunpack.c.h.b16 %v574
        %v944 = vunpack.c.l.b16 %v575
        %v945 = vunpack.c.h.b16 %v575
        %v946 = vunpack.c.l.b16 %v576
        %v947 = vunpack.c.h.b16 %v576
        %v948 = vunpack.c.l.b16 %v577
        %v949 = vunpack.c.h.b16 %v577
        %v950 = vunpack.c.l.b16 %v578
        %v951 = vunpack.c.h.b16 %v578
        %v952 = vunpack.c.l.b16 %v579
        %v953 = vunpack.c.h.b16 %v579
        %v954 = vunpack.c.l.b16 %v580
        %v955 = vunpack.c.h.b16 %v580
        %v956 = vunpack.c.l.b16 %v581
        %v957 = vunpack.c.h.b16 %v581
        %v958 = vunpack.c.l.b16 %v582
        %v959 = vunpack.c.h.b16 %v582
        %v960 = vunpack.c.l.b16 %v583
        %v961 = vunpack.c.h.b16 %v583
        %v962 = vunpack.c.l.b16 %v584
        %v963 = vunpack.c.h.b16 %v584
        %v964 = vunpack.c.l.b16 %v585
        %v965 = vunpack.c.h.b16 %v585
        %v966 = vunpack.c.l.b16 %v586
        %v967 = vunpack.c.h.b16 %v586
        %v968 = vunpack.c.l.b16 %v587
        %v969 = vunpack.c.h.b16 %v587
        %v970 = vunpack.c.l.b16 %v588
        %v971 = vunpack.c.h.b16 %v588
        %v972 = vunpack.c.l.b16 %v589
        %v973 = vunpack.c.h.b16 %v589
        %v974 = vunpack.c.l.b16 %v590
        %v975 = vunpack.c.h.b16 %v590
        %v976 = vunpack.c.l.b16 %v591
        %v977 = vunpack.c.h.b16 %v591
        %v978 = vunpack.c.l.b16 %v592
        %v979 = vunpack.c.h.b16 %v592
        %v980 = vunpack.c.l.b16 %v593
        %v981 = vunpack.c.h.b16 %v593
        %v982 = vunpack.c.l.b16 %v594
        %v983 = vunpack.c.h.b16 %v594
        %v984 = vunpack.c.l.b16 %v595
        %v985 = vunpack.c.h.b16 %v595
        %v986 = vunpack.c.l.b16 %v596
        %v987 = vunpack.c.h.b16 %v596
        %v988 = vunpack.c.l.b16 %v597
        %v989 = vunpack.c.h.b16 %v597
        %v990 = vunpack.c.l.b16 %v598
        %v991 = vunpack.c.h.b16 %v598
        %v992 = vunpack.c.l.b16 %v599
        %v993 = vunpack.c.h.b16 %v599
        %v994 = vunpack.c.l.b16 %v600
        %v995 = vunpack.c.h.b16 %v600
        %v996 = vunpack.c.l.b16 %v601
        %v997 = vunpack.c.h.b16 %v601
        %v998 = vunpack.c.l.b16 %v602
        %v999 = vunpack.c.h.b16 %v602
        %v1000 = vunpack.c.l.b16 %v603
        %v1001 = vunpack.c.h.b16 %v603
        %v1002 = vunpack.c.l.b16 %v604
        %v1003 = vunpack.c.h.b16 %v604
        %v1004 = vunpack.c.l.b16 %v605
        %v1005 = vunpack.c.h.b16 %v605
        %v1006 = vunpack.c.l.b16 %v606
        %v1007 = vunpack.c.h.b16 %v606
        %v1008 = vunpack.c.l.b16 %v607
        %v1009 = vunpack.c.h.b16 %v607
        %v1010 = vunpack.c.l.b16 %v608
        %v1011 = vunpack.c.h.b16 %v608
        %v1012 = vunpack.c.l.b16 %v609
        %v1013 = vunpack.c.h.b16 %v609
        %v1014 = vunpack.c.l.b16 %v610
        %v1015 = vunpack.c.h.b16 %v610
        %v1016 = vunpack.c.l.b16 %v611
        %v1017 = vunpack.c.h.b16 %v611
        %v1018 = vunpack.c.l.b16 %v612
        %v1019 = vunpack.c.h.b16 %v612
        %v1020 = vunpack.c.l.b16 %v613
        %v1021 = vunpack.c.h.b16 %v613
        %v1022 = vunpack.c.l.b16 %v614
        %v1023 = vunpack.c.h.b16 %v614
        %v1024 = vunpack.c.l.b16 %v615
        %v1025 = vunpack.c.h.b16 %v615
        %v1026 = vunpack.c.l.b16 %v616
        %v1027 = vunpack.c.h.b16 %v616
        %v1028 = vunpack.c.l.b16 %v617
        %v1029 = vunpack.c.h.b16 %v617
        %v1030 = vunpack.c.l.b16 %v618
        %v1031 = vunpack.c.h.b16 %v618
        %v1032 = vunpack.c.l.b16 %v619
        %v1033 = vunpack.c.h.b16 %v619
        %v1034 = vunpack.c.l.b16 %v620
        %v1035 = vunpack.c.h.b16 %v620
        %v1036 = vunpack.c.l.b16 %v621
        %v1037 = vunpack.c.h.b16 %v621
        %v1038 = vunpack.c.l.b16 %v622
        %v1039 = vunpack.c.h.b16 %v622
        %v1040 = vunpack.c.l.b16 %v623
        %v1041 = vunpack.c.h.b16 %v623
        %v1042 = vunpack.c.l.b16 %v624
        %v1043 = vunpack.c.h.b16 %v624
        %v1044 = vunpack.c.l.b16 %v625
        %v1045 = vunpack.c.h.b16 %v625
        %v1046 = vunpack.c.l.b16 %v626
        %v1047 = vunpack.c.h.b16 %v626
        %v1048 = vunpack.c.l.b16 %v627
        %v1049 = vunpack.c.h.b16 %v627
        %v1050 = vunpack.c.l.b16 %v628
        %v1051 = vunpack.c.h.b16 %v628
        %v1052 = vunpack.c.l.b16 %v629
        %v1053 = vunpack.c.h.b16 %v629
        %v1054 = vpack.c.b16 %v800, %v798
        %v1055 = vpack.c.b16 %v801, %v799
        %v1056 = vpack.c.b16 %v804, %v802
        %v1057 = vpack.c.b16 %v805, %v803
        %v1058 = vpack.c.b16 %v808, %v806
        %v1059 = vpack.c.b16 %v809, %v807
        %v1060 = vpack.c.b16 %v812, %v810
        %v1061 = vpack.c.b16 %v813, %v811
        %v1062 = vpack.c.b16 %v816, %v814
        %v1063 = vpack.c.b16 %v817, %v815
        %v1064 = vpack.c.b16 %v820, %v818
        %v1065 = vpack.c.b16 %v821, %v819
        %v1066 = vpack.c.b16 %v824, %v822
        %v1067 = vpack.c.b16 %v825, %v823
        %v1068 = vpack.c.b16 %v828, %v826
        %v1069 = vpack.c.b16 %v829, %v827
        %v1070 = vpack.c.b16 %v832, %v830
        %v1071 = vpack.c.b16 %v833, %v831
        %v1072 = vpack.c.b16 %v836, %v834
        %v1073 = vpack.c.b16 %v837, %v835
        %v1074 = vpack.c.b16 %v840, %v838
        %v1075 = vpack.c.b16 %v841, %v839
        %v1076 = vpack.c.b16 %v844, %v842
        %v1077 = vpack.c.b16 %v845, %v843
        %v1078 = vpack.c.b16 %v848, %v846
        %v1079 = vpack.c.b16 %v849, %v847
        %v1080 = vpack.c.b16 %v852, %v850
        %v1081 = vpack.c.b16 %v853, %v851
        %v1082 = vpack.c.b16 %v856, %v854
        %v1083 = vpack.c.b16 %v857, %v855
        %v1084 = vpack.c.b16 %v860, %v858
        %v1085 = vpack.c.b16 %v861, %v859
        %v1086 = vpack.c.b16 %v864, %v862
        %v1087 = vpack.c.b16 %v865, %v863
        %v1088 = vpack.c.b16 %v868, %v866
        %v1089 = vpack.c.b16 %v869, %v867
        %v1090 = vpack.c.b16 %v872, %v870
        %v1091 = vpack.c.b16 %v873, %v871
        %v1092 = vpack.c.b16 %v876, %v874
        %v1093 = vpack.c.b16 %v877, %v875
        %v1094 = vpack.c.b16 %v880, %v878
        %v1095 = vpack.c.b16 %v881, %v879
        %v1096 = vpack.c.b16 %v884, %v882
        %v1097 = vpack.c.b16 %v885, %v883
        %v1098 = vpack.c.b16 %v888, %v886
        %v1099 = vpack.c.b16 %v889, %v887
        %v1100 = vpack.c.b16 %v892, %v890
        %v1101 = vpack.c.b16 %v893, %v891
        %v1102 = vpack.c.b16 %v896, %v894
        %v1103 = vpack.c.b16 %v897, %v895
        %v1104 = vpack.c.b16 %v900, %v898
        %v1105 = vpack.c.b16 %v901, %v899
        %v1106 = vpack.c.b16 %v904, %v902
        %v1107 = vpack.c.b16 %v905, %v903
        %v1108 = vpack.c.b16 %v908, %v906
        %v1109 = vpack.c.b16 %v909, %v907
        %v1110 = vpack.c.b16 %v912, %v910
        %v1111 = vpack.c.b16 %v913, %v911
        %v1112 = vpack.c.b16 %v916, %v914
        %v1113 = vpack.c.b16 %v917, %v915
        %v1114 = vpack.c.b16 %v920, %v918
        %v1115 = vpack.c.b16 %v921, %v919
        %v1116 = vpack.c.b16 %v924, %v922
        %v1117 = vpack.c.b16 %v925, %v923
        %v1118 = vpack.c.b16 %v928, %v926
        %v1119 = vpack.c.b16 %v929, %v927
        %v1120 = vpack.c.b16 %v932, %v930
        %v1121 = vpack.c.b16 %v933, %v931
        %v1122 = vpack.c.b16 %v936, %v934
        %v1123 = vpack.c.b16 %v937, %v935
        %v1124 = vpack.c.b16 %v940, %v938
        %v1125 = vpack.c.b16 %v941, %v939
        %v1126 = vpack.c.b16 %v944, %v942
        %v1127 = vpack.c.b16 %v945, %v943
        %v1128 = vpack.c.b16 %v948, %v946
        %v1129 = vpack.c.b16 %v949, %v947
        %v1130 = vpack.c.b16 %v952, %v950
        %v1131 = vpack.c.b16 %v953, %v951
        %v1132 = vpack.c.b16 %v956, %v954
        %v1133 = vpack.c.b16 %v957, %v955
        %v1134 = vpack.c.b16 %v960, %v958
        %v1135 = vpack.c.b16 %v961, %v959
        %v1136 = vpack.c.b16 %v964, %v962
        %v1137 = vpack.c.b16 %v965, %v963
        %v1138 = vpack.c.b16 %v968, %v966
        %v1139 = vpack.c.b16 %v969, %v967
        %v1140 = vpack.c.b16 %v972, %v970
        %v1141 = vpack.c.b16 %v973, %v971
        %v1142 = vpack.c.b16 %v976, %v974
        %v1143 = vpack.c.b16 %v977, %v975
        %v1144 = vpack.c.b16 %v980, %v978
        %v1145 = vpack.c.b16 %v981, %v979
        %v1146 = vpack.c.b16 %v984, %v982
        %v1147 = vpack.c.b16 %v985, %v983
        %v1148 = vpack.c.b16 %v988, %v986
        %v1149 = vpack.c.b16 %v989, %v987
        %v1150 = vpack.c.b16 %v992, %v990
        %v1151 = vpack.c.b16 %v993, %v991
        %v1152 = vpack.c.b16 %v996, %v994
        %v1153 = vpack.c.b16 %v997, %v995
        %v1154 = vpack.c.b16 %v1000, %v998
        %v1155 = vpack.c.b16 %v1001, %v999
        %v1156 = vpack.c.b16 %v1004, %v1002
        %v1157 = vpack.c.b16 %v1005, %v1003
        %v1158 = vpack.c.b16 %v1008, %v1006
        %v1159 = vpack.c.b16 %v1009, %v1007
        %v1160 = vpack.c.b16 %v1012, %v1010
        %v1161 = vpack.c.b16 %v1013, %v1011
        %v1162 = vpack.c.b16 %v1016, %v1014
        %v1163 = vpack.c.b16 %v1017, %v1015
        %v1164 = vpack.c.b16 %v1020, %v1018
        %v1165 = vpack.c.b16 %v1021, %v1019
        %v1166 = vpack.c.b16 %v1024, %v1022
        %v1167 = vpack.c.b16 %v1025, %v1023
        %v1168 = vpack.c.b16 %v1028, %v1026
        %v1169 = vpack.c.b16 %v1029, %v1027
        %v1170 = vpack.c.b16 %v1032, %v1030
        %v1171 = vpack.c.b16 %v1033, %v1031
        %v1172 = vpack.c.b16 %v1036, %v1034
        %v1173 = vpack.c.b16 %v1037, %v1035
        %v1174 = vpack.c.b16 %v1040, %v1038
        %v1175 = vpack.c.b16 %v1041, %v1039
        %v1176 = vpack.c.b16 %v1044, %v1042
        %v1177 = vpack.c.b16 %v1045, %v1043
        %v1178 = vpack.c.b16 %v1048, %v1046
        %v1179 = vpack.c.b16 %v1049, %v1047
        %v1180 = vpack.c.b16 %v1052, %v1050
        %v1181 = vpack.c.b16 %v1053, %v1051
        %1310 = vmatprep.subr.bf16.mxu0 %v1069
        %1311 = vmatpush1.bf16.msra.mxu0 %v1068
        %1312 = vmatprep.subr.bf16.mxu0 %v1067
        %1313 = vmatpush1.bf16.msra.mxu0 %v1066
        %1314 = vmatprep.subr.bf16.mxu0 %v1065
        %1315 = vmatpush1.bf16.msra.mxu0 %v1064
        %1316 = vmatprep.subr.bf16.mxu0 %v1063
        %1317 = vmatpush1.bf16.msra.mxu0 %v1062
        %1318 = vmatprep.subr.bf16.mxu0 %v1061
        %1319 = vmatpush1.bf16.msra.mxu0 %v1060
        %1320 = vmatprep.subr.bf16.mxu0 %v1059
        %1321 = vmatpush1.bf16.msra.mxu0 %v1058
        %1322 = vmatprep.subr.bf16.mxu0 %v1057
        %1323 = vmatpush1.bf16.msra.mxu0 %v1056
        %1324 = vmatprep.subr.bf16.mxu0 %v1055
        %1325 = vmatpush1.bf16.msra.mxu0 %v1054
        %1326 = vmatprep.subr.bf16.mxu0 %v1085
        %1327 = vmatpush2.bf16.msra.mxu0 %v1084
        %1328 = vmatprep.subr.bf16.mxu0 %v1083
        %1329 = vmatpush2.bf16.msra.mxu0 %v1082
        %1330 = vmatprep.subr.bf16.mxu0 %v1081
        %1331 = vmatpush2.bf16.msra.mxu0 %v1080
        %1332 = vmatprep.subr.bf16.mxu0 %v1079
        %1333 = vmatpush2.bf16.msra.mxu0 %v1078
        %1334 = vmatprep.subr.bf16.mxu0 %v1077
        %1335 = vmatpush2.bf16.msra.mxu0 %v1076
        %1336 = vmatprep.subr.bf16.mxu0 %v1075
        %1337 = vmatpush2.bf16.msra.mxu0 %v1074
        %1338 = vmatprep.subr.bf16.mxu0 %v1073
        %1339 = vmatpush2.bf16.msra.mxu0 %v1072
        %1340 = vmatprep.subr.bf16.mxu0 %v1071
        %1341 = vmatpush2.bf16.msra.mxu0 %v1070
        %1342 = vmatprep.mubr.bf16.mxu0 %v655
        %1343 = vmatmul.mubr.bf16.gmra.mxu0 %v654
        %v1344 = vpop.f32.mrf.mxu0
        %v1345 = vadd.f32 0.0, %v1344
        %v1346 = vpop.f32.mrf.mxu0
        %v1347 = vadd.f32 0.0, %v1346
        %v1348 = vpop.f32.mrf.mxu0
        %v1349 = vadd.f32 0.0, %v1348
        %v1350 = vpop.f32.mrf.mxu0
        %v1351 = vadd.f32 0.0, %v1350
        %1352 = vdwg.mxu0
        %1353 = vmatprep.subr.bf16.mxu0 %v1101
        %1354 = vmatpush1.bf16.msra.mxu0 %v1100
        %1355 = vmatprep.subr.bf16.mxu0 %v1099
        %1356 = vmatpush1.bf16.msra.mxu0 %v1098
        %1357 = vmatprep.subr.bf16.mxu0 %v1097
        %1358 = vmatpush1.bf16.msra.mxu0 %v1096
        %1359 = vmatprep.subr.bf16.mxu0 %v1095
        %1360 = vmatpush1.bf16.msra.mxu0 %v1094
        %1361 = vmatprep.subr.bf16.mxu0 %v1093
        %1362 = vmatpush1.bf16.msra.mxu0 %v1092
        %1363 = vmatprep.subr.bf16.mxu0 %v1091
        %1364 = vmatpush1.bf16.msra.mxu0 %v1090
        %1365 = vmatprep.subr.bf16.mxu0 %v1089
        %1366 = vmatpush1.bf16.msra.mxu0 %v1088
        %1367 = vmatprep.subr.bf16.mxu0 %v1087
        %1368 = vmatpush1.bf16.msra.mxu0 %v1086
        %1369 = vmatprep.subr.bf16.mxu0 %v1117
        %1370 = vmatpush2.bf16.msra.mxu0 %v1116
        %1371 = vmatprep.subr.bf16.mxu0 %v1115
        %1372 = vmatpush2.bf16.msra.mxu0 %v1114
        %1373 = vmatprep.subr.bf16.mxu0 %v1113
        %1374 = vmatpush2.bf16.msra.mxu0 %v1112
        %1375 = vmatprep.subr.bf16.mxu0 %v1111
        %1376 = vmatpush2.bf16.msra.mxu0 %v1110
        %1377 = vmatprep.subr.bf16.mxu0 %v1109
        %1378 = vmatpush2.bf16.msra.mxu0 %v1108
        %1379 = vmatprep.subr.bf16.mxu0 %v1107
        %1380 = vmatpush2.bf16.msra.mxu0 %v1106
        %1381 = vmatprep.subr.bf16.mxu0 %v1105
        %1382 = vmatpush2.bf16.msra.mxu0 %v1104
        %1383 = vmatprep.subr.bf16.mxu0 %v1103
        %1384 = vmatpush2.bf16.msra.mxu0 %v1102
        %1385 = vmatprep.mubr.bf16.mxu0 %v657
        %1386 = vmatmul.mubr.bf16.gmra.mxu0 %v656
        %v1387 = vpop.f32.mrf.mxu0
        %v1388 = vadd.f32 %v1345, %v1387
        %v1389 = vpop.f32.mrf.mxu0
        %v1390 = vadd.f32 %v1347, %v1389
        %v1391 = vpop.f32.mrf.mxu0
        %v1392 = vadd.f32 %v1349, %v1391
        %v1393 = vpop.f32.mrf.mxu0
        %v1394 = vadd.f32 %v1351, %v1393
        %1395 = vdwg.mxu0
        %1396 = vmatprep.subr.bf16.mxu0 %v1133
        %1397 = vmatpush1.bf16.msra.mxu0 %v1132
        %1398 = vmatprep.subr.bf16.mxu0 %v1131
        %1399 = vmatpush1.bf16.msra.mxu0 %v1130
        %1400 = vmatprep.subr.bf16.mxu0 %v1129
        %1401 = vmatpush1.bf16.msra.mxu0 %v1128
        %1402 = vmatprep.subr.bf16.mxu0 %v1127
        %1403 = vmatpush1.bf16.msra.mxu0 %v1126
        %1404 = vmatprep.subr.bf16.mxu0 %v1125
        %1405 = vmatpush1.bf16.msra.mxu0 %v1124
        %1406 = vmatprep.subr.bf16.mxu0 %v1123
        %1407 = vmatpush1.bf16.msra.mxu0 %v1122
        %1408 = vmatprep.subr.bf16.mxu0 %v1121
        %1409 = vmatpush1.bf16.msra.mxu0 %v1120
        %1410 = vmatprep.subr.bf16.mxu0 %v1119
        %1411 = vmatpush1.bf16.msra.mxu0 %v1118
        %1412 = vmatprep.subr.bf16.mxu0 %v1149
        %1413 = vmatpush2.bf16.msra.mxu0 %v1148
        %1414 = vmatprep.subr.bf16.mxu0 %v1147
        %1415 = vmatpush2.bf16.msra.mxu0 %v1146
        %1416 = vmatprep.subr.bf16.mxu0 %v1145
        %1417 = vmatpush2.bf16.msra.mxu0 %v1144
        %1418 = vmatprep.subr.bf16.mxu0 %v1143
        %1419 = vmatpush2.bf16.msra.mxu0 %v1142
        %1420 = vmatprep.subr.bf16.mxu0 %v1141
        %1421 = vmatpush2.bf16.msra.mxu0 %v1140
        %1422 = vmatprep.subr.bf16.mxu0 %v1139
        %1423 = vmatpush2.bf16.msra.mxu0 %v1138
        %1424 = vmatprep.subr.bf16.mxu0 %v1137
        %1425 = vmatpush2.bf16.msra.mxu0 %v1136
        %1426 = vmatprep.subr.bf16.mxu0 %v1135
        %1427 = vmatpush2.bf16.msra.mxu0 %v1134
        %1428 = vmatprep.mubr.bf16.mxu0 %v659
        %1429 = vmatmul.mubr.bf16.gmra.mxu0 %v658
        %v1430 = vpop.f32.mrf.mxu0
        %v1431 = vadd.f32 %v1388, %v1430
        %v1432 = vpop.f32.mrf.mxu0
        %v1433 = vadd.f32 %v1390, %v1432
        %v1434 = vpop.f32.mrf.mxu0
        %v1435 = vadd.f32 %v1392, %v1434
        %v1436 = vpop.f32.mrf.mxu0
        %v1437 = vadd.f32 %v1394, %v1436
        %1438 = vdwg.mxu0
        %1439 = vmatprep.subr.bf16.mxu0 %v1165
        %1440 = vmatpush1.bf16.msra.mxu0 %v1164
        %1441 = vmatprep.subr.bf16.mxu0 %v1163
        %1442 = vmatpush1.bf16.msra.mxu0 %v1162
        %1443 = vmatprep.subr.bf16.mxu0 %v1161
        %1444 = vmatpush1.bf16.msra.mxu0 %v1160
        %1445 = vmatprep.subr.bf16.mxu0 %v1159
        %1446 = vmatpush1.bf16.msra.mxu0 %v1158
        %1447 = vmatprep.subr.bf16.mxu0 %v1157
        %1448 = vmatpush1.bf16.msra.mxu0 %v1156
        %1449 = vmatprep.subr.bf16.mxu0 %v1155
        %1450 = vmatpush1.bf16.msra.mxu0 %v1154
        %1451 = vmatprep.subr.bf16.mxu0 %v1153
        %1452 = vmatpush1.bf16.msra.mxu0 %v1152
        %1453 = vmatprep.subr.bf16.mxu0 %v1151
        %1454 = vmatpush1.bf16.msra.mxu0 %v1150
        %1455 = vmatprep.subr.bf16.mxu0 %v1181
        %1456 = vmatpush2.bf16.msra.mxu0 %v1180
        %1457 = vmatprep.subr.bf16.mxu0 %v1179
        %1458 = vmatpush2.bf16.msra.mxu0 %v1178
        %1459 = vmatprep.subr.bf16.mxu0 %v1177
        %1460 = vmatpush2.bf16.msra.mxu0 %v1176
        %1461 = vmatprep.subr.bf16.mxu0 %v1175
        %1462 = vmatpush2.bf16.msra.mxu0 %v1174
        %1463 = vmatprep.subr.bf16.mxu0 %v1173
        %1464 = vmatpush2.bf16.msra.mxu0 %v1172
        %1465 = vmatprep.subr.bf16.mxu0 %v1171
        %1466 = vmatpush2.bf16.msra.mxu0 %v1170
        %1467 = vmatprep.subr.bf16.mxu0 %v1169
        %1468 = vmatpush2.bf16.msra.mxu0 %v1168
        %1469 = vmatprep.subr.bf16.mxu0 %v1167
        %1470 = vmatpush2.bf16.msra.mxu0 %v1166
        %1471 = vmatprep.mubr.bf16.mxu0 %v661
        %1472 = vmatmul.mubr.bf16.gmra.mxu0 %v660
        %v1473 = vpop.f32.mrf.mxu0
        %v1474 = vadd.f32 %v1431, %v1473
        %v1475 = vpop.f32.mrf.mxu0
        %v1476 = vadd.f32 %v1433, %v1475
        %v1477 = vpop.f32.mrf.mxu0
        %v1478 = vadd.f32 %v1435, %v1477
        %v1479 = vpop.f32.mrf.mxu0
        %v1480 = vadd.f32 %v1437, %v1479
        %1481 = vdwg.mxu0
        %v1482 = vmul.f32 %v1474, %v474
        %v1483 = vmul.f32 %v1476, %v474
        %v1484 = vmul.f32 %v1478, %v475
        %v1485 = vmul.f32 %v1480, %v475
        %v1486 = vld [vmem:[%s2] sm:$0x3]
        %v1488 = vlaneseq
        %v1489 = vshrl.u32 %v1488, 7
        %v1490 = vsub.s32 0, %v1489
        %v1491 = vrot.slane %v1486, %v1490
        %v1492 = vlaneseq
        %v1493 = vshrl.u32 %v1492, 7
        %v1494 = vsub.s32 1, %v1493
        %v1495 = vrot.slane %v1486, %v1494
        %v1498 = vadd.f32 %v1482, %v1491
        %v1499 = vadd.f32 %v1483, %v1495
        %v1500 = vadd.f32 %v1484, %v1491
        %v1501 = vadd.f32 %v1485, %v1495
        %v1502 = vmax.f32 %v1498, 0.0
        %v1503 = vmax.f32 %v1499, 0.0
        %v1504 = vmax.f32 %v1500, 0.0
        %v1505 = vmax.f32 %v1501, 0.0
        %v1506 = vpack.c.bf16 %v1504, %v1502
        %v1507 = vpack.c.bf16 %v1505, %v1503
        %v1508 = vld [vmem:[#allocation8] sm:$0xf]
        %v1509 = vld [vmem:[#allocation8 + $0x4] sm:$0xf]
        %v1510 = vld [vmem:[#allocation8 + $0x8] sm:$0xf]
        %v1511 = vld [vmem:[#allocation8 + $0xc] sm:$0xf]
        %v1512 = vld [vmem:[#allocation8 + $0x10] sm:$0xf]
        %v1513 = vld [vmem:[#allocation8 + $0x14] sm:$0xf]
        %v1514 = vld [vmem:[#allocation8 + $0x18] sm:$0xf]
        %v1515 = vld [vmem:[#allocation8 + $0x1c] sm:$0xf]
        %v1516 = vld [vmem:[#allocation8 + $0x20] sm:$0xf]
        %v1517 = vld [vmem:[#allocation8 + $0x24] sm:$0xf]
        %v1518 = vld [vmem:[#allocation8 + $0x28] sm:$0xf]
        %v1519 = vld [vmem:[#allocation8 + $0x2c] sm:$0xf]
        %v1520 = vld [vmem:[#allocation8 + $0x30] sm:$0xf]
        %v1521 = vld [vmem:[#allocation8 + $0x34] sm:$0xf]
        %v1522 = vld [vmem:[#allocation8 + $0x38] sm:$0xf]
        %v1523 = vld [vmem:[#allocation8 + $0x3c] sm:$0xf]
        %v1524 = vld [vmem:[#allocation8 + $0x40] sm:$0xf]
        %v1525 = vld [vmem:[#allocation8 + $0x44] sm:$0xf]
        %v1526 = vld [vmem:[#allocation8 + $0x48] sm:$0xf]
        %v1527 = vld [vmem:[#allocation8 + $0x4c] sm:$0xf]
        %v1528 = vld [vmem:[#allocation8 + $0x50] sm:$0xf]
        %v1529 = vld [vmem:[#allocation8 + $0x54] sm:$0xf]
        %v1530 = vld [vmem:[#allocation8 + $0x58] sm:$0xf]
        %v1531 = vld [vmem:[#allocation8 + $0x5c] sm:$0xf]
        %v1532 = vld [vmem:[#allocation8 + $0x60] sm:$0xf]
        %v1533 = vld [vmem:[#allocation8 + $0x64] sm:$0xf]
        %v1534 = vld [vmem:[#allocation8 + $0x68] sm:$0xf]
        %v1535 = vld [vmem:[#allocation8 + $0x6c] sm:$0xf]
        %v1536 = vld [vmem:[#allocation8 + $0x70] sm:$0xf]
        %v1537 = vld [vmem:[#allocation8 + $0x74] sm:$0xf]
        %v1538 = vld [vmem:[#allocation8 + $0x78] sm:$0xf]
        %v1539 = vld [vmem:[#allocation8 + $0x7c] sm:$0xf]
        %v1540 = vld [vmem:[%s4] sm:$0x1]
        %v1542 = vlaneseq
        %v1543 = vshrl.u32 %v1542, 7
        %v1544 = vsub.s32 0, %v1543
        %v1545 = vrot.slane %v1540, %v1544
        %v1579 = vunpack.c.l.b16 %v1508
        %v1580 = vunpack.c.l.b16 %v1509
        %v1581 = vunpack.c.l.b16 %v1510
        %v1582 = vunpack.c.l.b16 %v1511
        %v1583 = vunpack.c.l.b16 %v1512
        %v1584 = vunpack.c.l.b16 %v1513
        %v1585 = vunpack.c.l.b16 %v1514
        %v1586 = vunpack.c.l.b16 %v1515
        %v1587 = vunpack.c.l.b16 %v1516
        %v1588 = vunpack.c.l.b16 %v1517
        %v1589 = vunpack.c.l.b16 %v1518
        %v1590 = vunpack.c.l.b16 %v1519
        %v1591 = vunpack.c.l.b16 %v1520
        %v1592 = vunpack.c.l.b16 %v1521
        %v1593 = vunpack.c.l.b16 %v1522
        %v1594 = vunpack.c.l.b16 %v1523
        %v1595 = vunpack.c.l.b16 %v1524
        %v1596 = vunpack.c.l.b16 %v1525
        %v1597 = vunpack.c.l.b16 %v1526
        %v1598 = vunpack.c.l.b16 %v1527
        %v1599 = vunpack.c.l.b16 %v1528
        %v1600 = vunpack.c.l.b16 %v1529
        %v1601 = vunpack.c.l.b16 %v1530
        %v1602 = vunpack.c.l.b16 %v1531
        %v1603 = vunpack.c.l.b16 %v1532
        %v1604 = vunpack.c.l.b16 %v1533
        %v1605 = vunpack.c.l.b16 %v1534
        %v1606 = vunpack.c.l.b16 %v1535
        %v1607 = vunpack.c.l.b16 %v1536
        %v1608 = vunpack.c.l.b16 %v1537
        %v1609 = vunpack.c.l.b16 %v1538
        %v1610 = vunpack.c.l.b16 %v1539
        %v1611 = vpack.c.b16 %v1580, %v1579
        %v1612 = vpack.c.b16 %v1582, %v1581
        %v1613 = vpack.c.b16 %v1584, %v1583
        %v1614 = vpack.c.b16 %v1586, %v1585
        %v1615 = vpack.c.b16 %v1588, %v1587
        %v1616 = vpack.c.b16 %v1590, %v1589
        %v1617 = vpack.c.b16 %v1592, %v1591
        %v1618 = vpack.c.b16 %v1594, %v1593
        %v1619 = vpack.c.b16 %v1596, %v1595
        %v1620 = vpack.c.b16 %v1598, %v1597
        %v1621 = vpack.c.b16 %v1600, %v1599
        %v1622 = vpack.c.b16 %v1602, %v1601
        %v1623 = vpack.c.b16 %v1604, %v1603
        %v1624 = vpack.c.b16 %v1606, %v1605
        %v1625 = vpack.c.b16 %v1608, %v1607
        %v1626 = vpack.c.b16 %v1610, %v1609
        %1643 = vmatprep.subr.bf16.mxu0 0
        %1644 = vmatpush1.bf16.msra.mxu0 %v1618
        %1645 = vmatprep.subr.bf16.mxu0 0
        %1646 = vmatpush1.bf16.msra.mxu0 %v1617
        %1647 = vmatprep.subr.bf16.mxu0 0
        %1648 = vmatpush1.bf16.msra.mxu0 %v1616
        %1649 = vmatprep.subr.bf16.mxu0 0
        %1650 = vmatpush1.bf16.msra.mxu0 %v1615
        %1651 = vmatprep.subr.bf16.mxu0 0
        %1652 = vmatpush1.bf16.msra.mxu0 %v1614
        %1653 = vmatprep.subr.bf16.mxu0 0
        %1654 = vmatpush1.bf16.msra.mxu0 %v1613
        %1655 = vmatprep.subr.bf16.mxu0 0
        %1656 = vmatpush1.bf16.msra.mxu0 %v1612
        %1657 = vmatprep.subr.bf16.mxu0 0
        %1658 = vmatpush1.bf16.msra.mxu0 %v1611
        %1659 = vmatprep.subr.bf16.mxu0 0
        %1660 = vmatpush2.bf16.msra.mxu0 %v1626
        %1661 = vmatprep.subr.bf16.mxu0 0
        %1662 = vmatpush2.bf16.msra.mxu0 %v1625
        %1663 = vmatprep.subr.bf16.mxu0 0
        %1664 = vmatpush2.bf16.msra.mxu0 %v1624
        %1665 = vmatprep.subr.bf16.mxu0 0
        %1666 = vmatpush2.bf16.msra.mxu0 %v1623
        %1667 = vmatprep.subr.bf16.mxu0 0
        %1668 = vmatpush2.bf16.msra.mxu0 %v1622
        %1669 = vmatprep.subr.bf16.mxu0 0
        %1670 = vmatpush2.bf16.msra.mxu0 %v1621
        %1671 = vmatprep.subr.bf16.mxu0 0
        %1672 = vmatpush2.bf16.msra.mxu0 %v1620
        %1673 = vmatprep.subr.bf16.mxu0 0
        %1674 = vmatpush2.bf16.msra.mxu0 %v1619
        %1675 = vmatprep.mubr.bf16.mxu0 %v1507
        %1676 = vmatmul.mubr.bf16.gmra.mxu0 %v1506
        %v1677 = vpop.f32.mrf.mxu0
        %v1678 = vadd.f32 %v1545, %v1677
        %v1679 = vpop.f32.mrf.mxu0
        %v1680 = vpop.f32.mrf.mxu0
        %v1681 = vadd.f32 %v1545, %v1680
        %v1682 = vpop.f32.mrf.mxu0
        %1683 = vdwg.mxu0
        %v1684 = vmax.f32 %v1678, 0.0
        %v1685 = vmax.f32 %v1681, 0.0
        %1686 = vadd.xlane.f32.xlu0 %v1684
        %v1687 = vpop.xlane.xlu0 %1686
        %1688 = vadd.xlane.f32.xlu0 %v1685
        %v1689 = vpop.xlane.xlu0 %1688
        %v1690 = vrcp.pop 128.0
        %v1691 = vmul.f32 %v1687, %v1690
        %v1692 = vmul.f32 %v1689, %v1690
        %v1693 = vmul.f32 %v1684, %v1684
        %v1694 = vmul.f32 %v1685, %v1685
        %1695 = vadd.xlane.f32.xlu0 %v1693
        %v1696 = vpop.xlane.xlu0 %1695
        %1697 = vadd.xlane.f32.xlu0 %v1694
        %v1698 = vpop.xlane.xlu0 %1697
        %v1699 = vmul.f32 %v1696, %v1690
        %v1700 = vmul.f32 %v1698, %v1690
        %v1701 = vmul.f32 %v1691, %v1691
        %v1702 = vmul.f32 %v1692, %v1692
        %v1703 = vsub.f32 %v1699, %v1701
        %v1704 = vsub.f32 %v1700, %v1702
        %v1705 = vmax.f32 %v1703, 0.0
        %v1706 = vmax.f32 %v1704, 0.0
        %v1707 = vadd.f32 %v1705, 1e-05
        %v1708 = vadd.f32 %v1706, 1e-05
        %v1709 = vrsqrt.pop %v1707
        %v1710 = vrsqrt.pop %v1708
        %v1711 = vsub.f32 %v1684, %v1691
        %v1712 = vsub.f32 %v1685, %v1692
        %v1713 = vpack.c.bf16 %v1712, %v1711
        %v1714 = vld [vmem:[%s5] sm:$0xf]
        %v1715 = vld [vmem:[%s5 + $0x4] sm:$0xf]
        %v1716 = vld [vmem:[%s5 + $0x8] sm:$0xf]
        %v1717 = vld [vmem:[%s5 + $0xc] sm:$0xf]
        %v1718 = vld [vmem:[%s5 + $0x10] sm:$0xf]
        %v1719 = vld [vmem:[%s5 + $0x14] sm:$0xf]
        %v1720 = vld [vmem:[%s5 + $0x18] sm:$0xf]
        %v1721 = vld [vmem:[%s5 + $0x1c] sm:$0xf]
        %v1722 = vld [vmem:[%s5 + $0x20] sm:$0xf]
        %v1723 = vld [vmem:[%s5 + $0x24] sm:$0xf]
        %v1724 = vld [vmem:[%s5 + $0x28] sm:$0xf]
        %v1725 = vld [vmem:[%s5 + $0x2c] sm:$0xf]
        %v1726 = vld [vmem:[%s5 + $0x30] sm:$0xf]
        %v1727 = vld [vmem:[%s5 + $0x34] sm:$0xf]
        %v1728 = vld [vmem:[%s5 + $0x38] sm:$0xf]
        %v1729 = vld [vmem:[%s5 + $0x3c] sm:$0xf]
        %v1746 = vunpack.c.l.b16 %v1714
        %v1747 = vunpack.c.l.b16 %v1715
        %v1748 = vunpack.c.l.b16 %v1716
        %v1749 = vunpack.c.l.b16 %v1717
        %v1750 = vunpack.c.l.b16 %v1718
        %v1751 = vunpack.c.l.b16 %v1719
        %v1752 = vunpack.c.l.b16 %v1720
        %v1753 = vunpack.c.l.b16 %v1721
        %v1754 = vunpack.c.l.b16 %v1722
        %v1755 = vunpack.c.l.b16 %v1723
        %v1756 = vunpack.c.l.b16 %v1724
        %v1757 = vunpack.c.l.b16 %v1725
        %v1758 = vunpack.c.l.b16 %v1726
        %v1759 = vunpack.c.l.b16 %v1727
        %v1760 = vunpack.c.l.b16 %v1728
        %v1761 = vunpack.c.l.b16 %v1729
        %v1762 = vpack.c.b16 %v1747, %v1746
        %v1763 = vpack.c.b16 %v1749, %v1748
        %v1764 = vpack.c.b16 %v1751, %v1750
        %v1765 = vpack.c.b16 %v1753, %v1752
        %v1766 = vpack.c.b16 %v1755, %v1754
        %v1767 = vpack.c.b16 %v1757, %v1756
        %v1768 = vpack.c.b16 %v1759, %v1758
        %v1769 = vpack.c.b16 %v1761, %v1760
        %1778 = vmatprep.subr.bf16.mxu0 0
        %1779 = vmatpush1.bf16.msra.mxu0 %v1769
        %1780 = vmatprep.subr.bf16.mxu0 0
        %1781 = vmatpush1.bf16.msra.mxu0 %v1768
        %1782 = vmatprep.subr.bf16.mxu0 0
        %1783 = vmatpush1.bf16.msra.mxu0 %v1767
        %1784 = vmatprep.subr.bf16.mxu0 0
        %1785 = vmatpush1.bf16.msra.mxu0 %v1766
        %1786 = vmatprep.subr.bf16.mxu0 0
        %1787 = vmatpush1.bf16.msra.mxu0 %v1765
        %1788 = vmatprep.subr.bf16.mxu0 0
        %1789 = vmatpush1.bf16.msra.mxu0 %v1764
        %1790 = vmatprep.subr.bf16.mxu0 0
        %1791 = vmatpush1.bf16.msra.mxu0 %v1763
        %1792 = vmatprep.subr.bf16.mxu0 0
        %1793 = vmatpush1.bf16.msra.mxu0 %v1762
        %1794 = vmatprep.subr.bf16.mxu0 0
        %1795 = vmatpush2.bf16.msra.mxu0 0
        %1796 = vmatprep.subr.bf16.mxu0 0
        %1797 = vmatpush2.bf16.msra.mxu0 0
        %1798 = vmatprep.subr.bf16.mxu0 0
        %1799 = vmatpush2.bf16.msra.mxu0 0
        %1800 = vmatprep.subr.bf16.mxu0 0
        %1801 = vmatpush2.bf16.msra.mxu0 0
        %1802 = vmatprep.subr.bf16.mxu0 0
        %1803 = vmatpush2.bf16.msra.mxu0 0
        %1804 = vmatprep.subr.bf16.mxu0 0
        %1805 = vmatpush2.bf16.msra.mxu0 0
        %1806 = vmatprep.subr.bf16.mxu0 0
        %1807 = vmatpush2.bf16.msra.mxu0 0
        %1808 = vmatprep.subr.bf16.mxu0 0
        %1809 = vmatpush2.bf16.msra.mxu0 0
        %1810 = vmatprep.mubr.bf16.mxu0 0
        %1811 = vmatmul.mubr.bf16.gmra.mxu0 %v1713
        %v1812 = vpop.f32.mrf.mxu0
        %v1813 = vadd.f32 0.0, %v1812
        %v1814 = vpop.f32.mrf.mxu0
        %v1815 = vpop.f32.mrf.mxu0
        %v1816 = vadd.f32 0.0, %v1815
        %v1817 = vpop.f32.mrf.mxu0
        %1818 = vdwg.mxu0
        %v1819 = vmul.f32 %v1813, %v1709
        %v1820 = vmul.f32 %v1816, %v1710
        %v1821 = vld [vmem:[%s6] sm:$0x1]
        %v1823 = vlaneseq
        %v1824 = vshrl.u32 %v1823, 7
        %v1825 = vsub.s32 0, %v1824
        %v1826 = vrot.slane %v1821, %v1825
        %v1828 = vadd.f32 %v1819, %v1826
        %v1829 = vadd.f32 %v1820, %v1826
        %v1830 = vmax.f32 %v1828, 0.0
        %v1831 = vmax.f32 %v1829, 0.0
        %vm1832 = vcmask 261120
        %v1833 = vsel %vm1832, %v1830, 0.0
        %1834 = vadd.xlane.f32.xlu0 %v1833
        %v1835 = vpop.xlane.xlu0 %1834
        %v1836 = vsel %vm1832, %v1831, 0.0
        %1837 = vadd.xlane.f32.xlu0 %v1836
        %v1838 = vpop.xlane.xlu0 %1837
        %v1839 = vrcp.pop 32.0
        %v1840 = vmul.f32 %v1835, %v1839
        %v1841 = vmul.f32 %v1838, %v1839
        %v1842 = vmul.f32 %v1830, %v1830
        %v1843 = vmul.f32 %v1831, %v1831
        %v1844 = vsel %vm1832, %v1842, 0.0
        %1845 = vadd.xlane.f32.xlu0 %v1844
        %v1846 = vpop.xlane.xlu0 %1845
        %v1847 = vsel %vm1832, %v1843, 0.0
        %1848 = vadd.xlane.f32.xlu0 %v1847
        %v1849 = vpop.xlane.xlu0 %1848
        %v1850 = vmul.f32 %v1846, %v1839
        %v1851 = vmul.f32 %v1849, %v1839
        %v1852 = vmul.f32 %v1840, %v1840
        %v1853 = vmul.f32 %v1841, %v1841
        %v1854 = vsub.f32 %v1850, %v1852
        %v1855 = vsub.f32 %v1851, %v1853
        %v1856 = vmax.f32 %v1854, 0.0
        %v1857 = vmax.f32 %v1855, 0.0
        %v1858 = vadd.f32 %v1856, 1e-05
        %v1859 = vadd.f32 %v1857, 1e-05
        %v1860 = vrsqrt.pop %v1858
        %v1861 = vrsqrt.pop %v1859
        %v1862 = vsub.f32 %v1830, %v1840
        %v1863 = vsub.f32 %v1831, %v1841
        %v1864 = vld [vmem:[%s7] sm:$0x1]
        %v1866 = vlaneseq
        %v1867 = vshrl.u32 %v1866, 7
        %v1868 = vsub.s32 0, %v1867
        %v1869 = vrot.slane %v1864, %v1868
        %v1871 = vmul.f32 %v1862, %v1869
        %v1872 = vmul.f32 %v1863, %v1869
        %v1873 = vsel %vm1832, %v1871, 0.0
        %1874 = vadd.xlane.f32.xlu0 %v1873
        %v1875 = vpop.xlane.xlu0 %1874
        %v1876 = vsel %vm1832, %v1872, 0.0
        %1877 = vadd.xlane.f32.xlu0 %v1876
        %v1878 = vpop.xlane.xlu0 %1877
        %v1879 = vmul.f32 %v1875, %v1860
        %v1880 = vmul.f32 %v1878, %v1861
        %v1881 = vld [vmem:[#allocation2] sm:$0x1]
        %v1883 = vlaneseq
        %v1884 = vshrl.u32 %v1883, 7
        %v1885 = vsub.s32 0, %v1884
        %v1886 = vrot.slane %v1881, %v1885
        %v1888 = vadd.f32 %v1879, %v1886
        %v1889 = vadd.f32 %v1880, %v1886
        %1892 = vset.pattern.permute.xlu0 0
        %1893 = vperm.xlu0 %1892, %v1888
        %v1894 = vpop.permute.xlu0 %1893
        %1895 = vset.pattern.permute.xlu0 0
        %1896 = vperm.xlu0 %1895, %v1889
        %v1897 = vpop.permute.xlu0 %1896
        %v1898 = vlaneseq
        %v1899 = vand.u32 %v1898, 127
        %v1900 = vlaneseq
        %v1901 = vshrl.u32 %v1900, 7
        %v1902 = vsub.s32 %v1899, %v1901
        %v1903 = vrot.slane %v1894, %v1902
        %v1904 = vadd.s32 %v1899, 4294967288
        %v1905 = vlaneseq
        %v1906 = vshrl.u32 %v1905, 7
        %v1907 = vsub.s32 %v1904, %v1906
        %v1908 = vrot.slane %v1897, %v1907
        %vm1909 = vcmask 130112
        %v1910 = vsel %vm1909, %v1908, %v1903
        %vm1911 = vcmask 1042434
        %v1912 = vsel %vm1911, %v1910, %v1910
        %vm1913 = vcmask 1043459
        %v1914 = vsel %vm1913, %v1910, %v1912
        %vm1915 = vcmask 1044484
        %v1916 = vsel %vm1915, %v1910, %v1914
        %vm1917 = vcmask 1045509
        %v1918 = vsel %vm1917, %v1910, %v1916
        %vm1919 = vcmask 1046534
        %v1920 = vsel %vm1919, %v1910, %v1918
        %vm1921 = vcmask 1047559
        %v1922 = vsel %vm1921, %v1910, %v1920
        %vm1924 = vcmask 130048
        %1925 = vst.msk [vmem:[%s382] sm:$0xff] %vm1924, %v1922
        %s1926 = sand.u32 %s231, 1
        %s1927 = scalar_lea.sflag [#allocation5], %s1926
        %s1928 = sand.u32 %s231, 1
        %s1929 = smul.addr %s1928, 8
        %s1930 = scalar_lea.vmem [#allocation9], %s1929
        // Predicated region
        $region69: #{tpu_custom_call.1} parent=55 // pred_check
          %p1931 = pneg %p241
        $region70: #{tpu_custom_call.1} parent=55 // pred_check_branch
          %1933 = sbr.rel (%p1931) target = $region72
        $region71: #{tpu_custom_call.1} parent=55 // pred_region
          %s1935 = ssub.s32 128, 128
          %1936 = vsyncadd %s1927, %s1935
          %s1937 = smul.addr %s29, 128
          %s1938 = scalar_lea.hbm %s9, %s1937
          %s1940 = sshll.u32 %s1930, 4
          %s1941 = int_to_ptr.vmem [resolvable:$true] %s1940
          %1943 = dma.vmem_to_hbm [thread:$0]  %s1941, 128, %s1938, %s1927
        $region72: #{tpu_custom_call.1} parent=55 // pred_fallthru
          _
      $region56: #{tpu_custom_call.1} parent=5 // pred_fallthru
        _
      %p1944 = scmp.le.s32.totalorder 2, %s24
      // Predicated region
      $region73: #{tpu_custom_call.1} parent=5 // pred_check
        %p1945 = pneg %p1944
      $region74: #{tpu_custom_call.1} parent=5 // pred_check_branch
        %1947 = sbr.rel (%p1945) target = $region76
      $region75: #{tpu_custom_call.1} parent=5 // pred_region
        %s1948 = ssub.s32 %s24, 2
        // Predicated region
        $region77: #{tpu_custom_call.1} parent=75 // pred_check
          %p1949 = pneg %p247
        $region78: #{tpu_custom_call.1} parent=75 // pred_check_branch
          %1951 = sbr.rel (%p1949) target = $region80
        $region79: #{tpu_custom_call.1} parent=75 // pred_region
          %s1952 = sand.u32 %s232, 1
          %s1953 = scalar_lea.sflag [#allocation5], %s1952
          %s1954 = sand.u32 %s232, 1
          %s1955 = smul.addr %s1954, 8
          %s1956 = scalar_lea.vmem [#allocation9], %s1955
          %1957 = dma.done %s1953, 128
        $region80: #{tpu_custom_call.1} parent=75 // pred_fallthru
          _
      $region76: #{tpu_custom_call.1} parent=5 // pred_fallthru
        _
    $region6: #{tpu_custom_call.1} parent=1 // loop_footer
      %s28 = sadd.s32 1, %s24
    $region7: #{tpu_custom_call.1} parent=1 // loop_footer_branch
      %23 = sbr.rel target = $region3
    $region8: #{tpu_custom_call.1} parent=1 // loop_exit
      _
    %1958 = vsyncpa [#allocation4], 1
    %s1959 = scalar_lea.sflag [#allocation4], 1
    %1960 = vsyncpa %s1959, 1
    %1961 = vsyncpa [#allocation7], 1
    %1962 = vsyncpa [#allocation5], 1
    %s1963 = scalar_lea.sflag [#allocation5], 1
    %1964 = vsyncpa %s1963, 1

</llo_original>
